<compile_context>
chip_gen: v7x
topology: tpu7x:2x2x1
jax: 0.10.0
libtpu: 0.0.40
codegen_flags: <defaults>
</compile_context>

<pallas_src>
import functools

import jax
import jax.numpy as jnp
from jax.experimental import pallas as pl
from jax.experimental.pallas import tpu as pltpu


def _round_up(x, m):
    return (x + m - 1) // m * m


def _row_tile(m, max_tile):
    """Pick a row tile (multiple of 8) and a padded row count that it divides."""
    mp = _round_up(m, 8)
    if mp <= max_tile:
        return mp, mp
    for t in range(max_tile, 7, -8):
        if mp % t == 0:
            return t, mp
    return max_tile, _round_up(mp, max_tile)


# --------------------------------------------------------------------------------------
# Kernel 1: tiled matmul with fused prologue (per-K-channel BN+ReLU on the LHS) and
# fused epilogue (per-N-channel BN / bias + ReLU / Sigmoid on the output).
# --------------------------------------------------------------------------------------
def _mm_kernel(a_ref, b_ref, si_ref, bi_ref, so_ref, bo_ref, o_ref, acc_ref, *,
               prologue, epilogue, act_in, act_out):
    @pl.when(pl.program_id(2) == 0)
    def _init():
        acc_ref[...] = jnp.zeros_like(acc_ref)

    a = a_ref[...]
    if prologue:
        af = a.astype(jnp.float32) * si_ref[...] + bi_ref[...]
        if act_in == "relu":
            af = jnp.maximum(af, 0.0)
        a = af.astype(jnp.bfloat16)
    acc_ref[...] += jnp.dot(a, b_ref[...], preferred_element_type=jnp.float32)

    @pl.when(pl.program_id(2) == pl.num_programs(2) - 1)
    def _finalize():
        y = acc_ref[...]
        if epilogue:
            y = y * so_ref[...] + bo_ref[...]
        if act_out == "relu":
            y = jnp.maximum(y, 0.0)
        elif act_out == "sigmoid":
            y = 1.0 / (1.0 + jnp.exp(-y))
        o_ref[...] = y.astype(o_ref.dtype)


def pallas_matmul_fused(a, b, *, scale_in=None, bias_in=None, act_in=None,
                        scale_out=None, bias_out=None, act_out=None,
                        out_dtype=jnp.bfloat16):
    """(M,K) @ (K,N) with optional fused input affine(+relu) and output affine(+act)."""
    M, K = a.shape
    K2, N = b.shape
    assert K == K2
    tm, Mp = _row_tile(M, 256)
    Kp = _round_up(K, 128)
    if Kp <= 512:
        tk = Kp
    elif Kp % 512 == 0:
        tk = 512
    elif Kp % 384 == 0:
        tk = 384
    elif Kp % 256 == 0:
        tk = 256
    else:
        tk = 128
    Np = _round_up(N, 128)
    tn = Np if Np <= 256 else (256 if Np % 256 == 0 else 128)

    prologue = scale_in is not None
    epilogue = (scale_out is not None) or (bias_out is not None)
    if scale_in is None:
        scale_in = jnp.ones((K,), jnp.float32)
    if bias_in is None:
        bias_in = jnp.zeros((K,), jnp.float32)
    if scale_out is None:
        scale_out = jnp.ones((N,), jnp.float32)
    if bias_out is None:
        bias_out = jnp.zeros((N,), jnp.float32)

    a_p = a.astype(jnp.bfloat16)
    if (Mp - M) or (Kp - K):
        a_p = jnp.pad(a_p, ((0, Mp - M), (0, Kp - K)))
    b_p = b.astype(jnp.bfloat16)
    if (Kp - K) or (Np - N):
        b_p = jnp.pad(b_p, ((0, Kp - K), (0, Np - N)))
    si = jnp.pad(scale_in.astype(jnp.float32), (0, Kp - K)).reshape(1, Kp)
    bi = jnp.pad(bias_in.astype(jnp.float32), (0, Kp - K)).reshape(1, Kp)
    so = jnp.pad(scale_out.astype(jnp.float32), (0, Np - N)).reshape(1, Np)
    bo = jnp.pad(bias_out.astype(jnp.float32), (0, Np - N)).reshape(1, Np)

    out_bytes = 2 if out_dtype == jnp.bfloat16 else 4
    out = pl.pallas_call(
        functools.partial(_mm_kernel, prologue=prologue, epilogue=epilogue,
                          act_in=act_in, act_out=act_out),
        grid=(Mp // tm, Np // tn, Kp // tk),
        in_specs=[pl.BlockSpec((tm, tk), lambda i, j, k: (i, k)),
                  pl.BlockSpec((tk, tn), lambda i, j, k: (k, j)),
                  pl.BlockSpec((1, tk), lambda i, j, k: (0, k)),
                  pl.BlockSpec((1, tk), lambda i, j, k: (0, k)),
                  pl.BlockSpec((1, tn), lambda i, j, k: (0, j)),
                  pl.BlockSpec((1, tn), lambda i, j, k: (0, j))],
        out_specs=pl.BlockSpec((tm, tn), lambda i, j, k: (i, j)),
        out_shape=jax.ShapeDtypeStruct((Mp, Np), out_dtype),
        scratch_shapes=[pltpu.VMEM((tm, tn), jnp.float32)],
        compiler_params=pltpu.CompilerParams(
            dimension_semantics=("parallel", "parallel", "arbitrary")),
        cost_estimate=pl.CostEstimate(
            flops=2 * Mp * Np * Kp,
            transcendentals=Mp * Np if act_out == "sigmoid" else 0,
            bytes_accessed=2 * Mp * Kp + 2 * Kp * Np + out_bytes * Mp * Np),
    )(a_p, b_p, si, bi, so, bo)
    if (Mp - M) or (Np - N):
        out = out[:M, :N]
    return out


# --------------------------------------------------------------------------------------
# Kernel 2: 3x3 same-padding conv (DenseNet growth conv). Per-image; im2col happens
# in-kernel on the VMEM-resident padded image (no HBM im2col matrix).
# --------------------------------------------------------------------------------------
def _conv3x3_kernel(x_ref, w_ref, o_ref):
    cin = x_ref.shape[3]
    oh = x_ref.shape[1] - 2
    owp = x_ref.shape[2] - 2          # multiple of 8 by construction
    ocp = o_ref.shape[2]
    acc = jnp.zeros((oh * owp, ocp), jnp.float32)
    for i in range(3):
        for j in range(3):
            patch = x_ref[0, i:i + oh, j:j + owp, :].reshape(oh * owp, cin)
            w_ij = w_ref[(3 * i + j) * cin:(3 * i + j + 1) * cin, :]
            acc = acc + jnp.dot(patch, w_ij, preferred_element_type=jnp.float32)
    o_ref[0] = acc.astype(o_ref.dtype)


def conv3x3_same(x, w_hwio):
    """x: (N,H,W,C) bf16, w: (3,3,C,OC), stride 1, pad 1, no bias, no activation."""
    N, H, W, C = x.shape
    OC = w_hwio.shape[3]
    OH, OW = H, W
    OWp = _round_up(OW, 8)            # keep in-kernel reshapes layout-trivial
    Cp = _round_up(C, 128)
    OCp = _round_up(OC, 128)
    xp = jnp.pad(x.astype(jnp.bfloat16),
                 ((0, 0), (1, 1), (1, 1 + OWp - OW), (0, Cp - C)))
    wp = jnp.pad(w_hwio, ((0, 0), (0, 0), (0, Cp - C), (0, OCp - OC)))
    wp = wp.reshape(9 * Cp, OCp).astype(jnp.bfloat16)
    out = pl.pallas_call(
        _conv3x3_kernel,
        grid=(N,),
        in_specs=[pl.BlockSpec((1, OH + 2, OWp + 2, Cp), lambda n: (n, 0, 0, 0)),
                  pl.BlockSpec((9 * Cp, OCp), lambda n: (0, 0))],
        out_specs=pl.BlockSpec((1, OH * OWp, OCp), lambda n: (n, 0, 0)),
        out_shape=jax.ShapeDtypeStruct((N, OH * OWp, OCp), jnp.bfloat16),
        compiler_params=pltpu.CompilerParams(dimension_semantics=("parallel",)),
        cost_estimate=pl.CostEstimate(
            flops=2 * N * OH * OWp * 9 * Cp * OCp,
            transcendentals=0,
            bytes_accessed=2 * (xp.size + wp.size + N * OH * OWp * OCp)),
    )(xp, wp)
    # TODO(synk): the 32 growth channels are lane-padded to 128 here; a preallocated
    # lane-aligned channel slab (input_output_aliases) would avoid the O(L^2) concat copies.
    return out.reshape(N, OH, OWp, OCp)[:, :, :OW, :OC]


# --------------------------------------------------------------------------------------
# Kernel 3: row-tiled affine + activation (used only for norm5 + relu).
# --------------------------------------------------------------------------------------
def _affine_act_kernel(x_ref, s_ref, b_ref, o_ref, *, act):
    y = x_ref[...].astype(jnp.float32) * s_ref[...] + b_ref[...]
    if act == "relu":
        y = jnp.maximum(y, 0.0)
    elif act == "sigmoid":
        y = 1.0 / (1.0 + jnp.exp(-y))
    o_ref[...] = y.astype(o_ref.dtype)


def pallas_affine_act(x, scale, bias, act, out_dtype=jnp.bfloat16):
    M, C = x.shape
    Cp = _round_up(C, 128)
    tm, Mp = _row_tile(M, 512)
    x_p = x
    if (Mp - M) or (Cp - C):
        x_p = jnp.pad(x, ((0, Mp - M), (0, Cp - C)))
    s_p = jnp.pad(scale.astype(jnp.float32), (0, Cp - C)).reshape(1, Cp)
    b_p = jnp.pad(bias.astype(jnp.float32), (0, Cp - C)).reshape(1, Cp)
    out = pl.pallas_call(
        functools.partial(_affine_act_kernel, act=act),
        grid=(Mp // tm,),
        in_specs=[pl.BlockSpec((tm, Cp), lambda i: (i, 0)),
                  pl.BlockSpec((1, Cp), lambda i: (0, 0)),
                  pl.BlockSpec((1, Cp), lambda i: (0, 0))],
        out_specs=pl.BlockSpec((tm, Cp), lambda i: (i, 0)),
        out_shape=jax.ShapeDtypeStruct((Mp, Cp), out_dtype),
        compiler_params=pltpu.CompilerParams(dimension_semantics=("parallel",)),
    )(x_p, s_p, b_p)
    if (Mp - M) or (Cp - C):
        out = out[:M, :C]
    return out


# --------------------------------------------------------------------------------------
# Kernel 4: row-tiled reduction over the leading axis (max / mean) - pooling windows.
# --------------------------------------------------------------------------------------
def _reduce0_kernel(x_ref, o_ref, *, op):
    x = x_ref[...].astype(jnp.float32)
    r = jnp.max(x, axis=0) if op == "max" else jnp.mean(x, axis=0)
    o_ref[...] = r.astype(o_ref.dtype)


def pallas_reduce_leading(x, op, out_dtype=jnp.bfloat16):
    R, M, C = x.shape
    Cp = _round_up(C, 128)
    tm, Mp = _row_tile(M, 512)
    pad_val = -jnp.inf if op == "max" else 0.0
    x_p = x
    if (Mp - M) or (Cp - C):
        x_p = jnp.pad(x, ((0, 0), (0, Mp - M), (0, Cp - C)), constant_values=pad_val)
    out = pl.pallas_call(
        functools.partial(_reduce0_kernel, op=op),
        grid=(Mp // tm,),
        in_specs=[pl.BlockSpec((R, tm, Cp), lambda i: (0, i, 0))],
        out_specs=pl.BlockSpec((tm, Cp), lambda i: (i, 0)),
        out_shape=jax.ShapeDtypeStruct((Mp, Cp), out_dtype),
        compiler_params=pltpu.CompilerParams(dimension_semantics=("parallel",)),
    )(x_p)
    if (Mp - M) or (Cp - C):
        out = out[:M, :C]
    return out


# --------------------------------------------------------------------------------------
# Kernel 5: per-image global average pool.
# --------------------------------------------------------------------------------------
def _gap_kernel(x_ref, o_ref):
    o_ref[...] = jnp.mean(x_ref[...].astype(jnp.float32), axis=1,
                          keepdims=True).astype(o_ref.dtype)


def global_avgpool(x):
    N, H, W, C = x.shape
    Cp = _round_up(C, 128)
    xr = x.reshape(N, H * W, C)
    if Cp != C:
        xr = jnp.pad(xr, ((0, 0), (0, 0), (0, Cp - C)))
    out = pl.pallas_call(
        _gap_kernel,
        grid=(N,),
        in_specs=[pl.BlockSpec((1, H * W, Cp), lambda n: (n, 0, 0))],
        out_specs=pl.BlockSpec((1, 1, Cp), lambda n: (n, 0, 0)),
        out_shape=jax.ShapeDtypeStruct((N, 1, Cp), jnp.float32),
        compiler_params=pltpu.CompilerParams(dimension_semantics=("parallel",)),
    )(xr)
    return out.reshape(N, Cp)[:, :C]


# --------------------------------------------------------------------------------------
# Glue: BN folding, im2col for the 7x7 stem, pooling window extraction.
# --------------------------------------------------------------------------------------
def _fold_bn(bn, eps=1e-5):
    scale = bn["gamma"] * jax.lax.rsqrt(bn["var"] + eps)
    bias = bn["beta"] - bn["mean"] * scale
    return scale.astype(jnp.float32), bias.astype(jnp.float32)


def _im2col(x, kh, kw, stride, pad):
    """Used only for the single 7x7 stem conv (K = 7*7*3 = 147)."""
    N, H, W, C = x.shape
    xp = jnp.pad(x, ((0, 0), (pad, pad), (pad, pad), (0, 0)))
    OH = (H + 2 * pad - kh) // stride + 1
    OW = (W + 2 * pad - kw) // stride + 1
    cols = []
    for i in range(kh):
        for j in range(kw):
            cols.append(xp[:, i:i + stride * OH:stride, j:j + stride * OW:stride, :])
    col = jnp.stack(cols, axis=3)          # (N, OH, OW, kh*kw, C)
    return col.reshape(N * OH * OW, kh * kw * C), OH, OW


def maxpool_3x3_s2_p1(x):
    # TODO(synk): window patches are still stacked in HBM before the reduce kernel;
    # an in-kernel strided-window read would remove this 9x copy.
    N, H, W, C = x.shape
    xp = jnp.pad(x, ((0, 0), (1, 1), (1, 1), (0, 0)), constant_values=-jnp.inf)
    OH = (H + 2 - 3) // 2 + 1
    OW = (W + 2 - 3) // 2 + 1
    patches = [xp[:, i:i + 2 * OH:2, j:j + 2 * OW:2, :]
               for i in range(3) for j in range(3)]
    stacked = jnp.stack(patches, axis=0).reshape(9, N * OH * OW, C)
    return pallas_reduce_leading(stacked, "max").reshape(N, OH, OW, C)


def avgpool_2x2_s2(x):
    N, H, W, C = x.shape
    OH, OW = H // 2, W // 2
    patches = [x[:, i::2, j::2, :] for i in range(2) for j in range(2)]
    stacked = jnp.stack(patches, axis=0).reshape(4, N * OH * OW, C)
    return pallas_reduce_leading(stacked, "mean").reshape(N, OH, OW, C)


# --------------------------------------------------------------------------------------
# DenseNet-121 definition
# --------------------------------------------------------------------------------------
GROWTH = 32
BN_SIZE = 4
BLOCK_CONFIG = (6, 12, 24, 16)
NUM_INIT_FEATURES = 64


def init_densenet121_params(key, out_size):
    keys = iter(jax.random.split(key, 4096))

    def nxt():
        return next(keys)

    def conv_w(kh, kw, cin, cout):
        fan_in = kh * kw * cin
        return jax.random.normal(nxt(), (kh, kw, cin, cout), jnp.float32) * jnp.sqrt(2.0 / fan_in)

    def bn_p(c):
        return dict(
            gamma=1.0 + 0.1 * jax.random.normal(nxt(), (c,), jnp.float32),
            beta=0.1 * jax.random.normal(nxt(), (c,), jnp.float32),
            mean=0.1 * jax.random.normal(nxt(), (c,), jnp.float32),
            var=0.9 + 0.2 * jax.random.uniform(nxt(), (c,), jnp.float32),
        )

    params = dict(
        conv0=conv_w(7, 7, 3, NUM_INIT_FEATURES),
        norm0=bn_p(NUM_INIT_FEATURES),
        blocks=[],
        transitions=[],
    )
    c = NUM_INIT_FEATURES
    for bi, n_layers in enumerate(BLOCK_CONFIG):
        layers = []
        for _ in range(n_layers):
            layers.append(dict(
                norm1=bn_p(c),
                conv1=conv_w(1, 1, c, BN_SIZE * GROWTH),
                norm2=bn_p(BN_SIZE * GROWTH),
                conv2=conv_w(3, 3, BN_SIZE * GROWTH, GROWTH),
            ))
            c += GROWTH
        params["blocks"].append(layers)
        if bi != len(BLOCK_CONFIG) - 1:
            params["transitions"].append(dict(norm=bn_p(c), conv=conv_w(1, 1, c, c // 2)))
            c //= 2
    params["norm5"] = bn_p(c)   # c == 1024 == classifier.in_features
    params["classifier_w"] = jax.random.normal(nxt(), (c, out_size), jnp.float32) * jnp.sqrt(1.0 / c)
    params["classifier_b"] = 0.01 * jax.random.normal(nxt(), (out_size,), jnp.float32)
    return params


def _conv_stem(x, w_hwio, bn_out):
    """conv 7x7 stride 2 pad 3, with norm0+relu fused into the matmul epilogue."""
    col, OH, OW = _im2col(x, 7, 7, 2, 3)
    so, bo = _fold_bn(bn_out)
    y = pallas_matmul_fused(col, w_hwio.reshape(-1, w_hwio.shape[3]),
                            scale_out=so, bias_out=bo, act_out="relu")
    return y.reshape(x.shape[0], OH, OW, -1)


def _dense_layer(x, lp):
    """norm1+relu -> conv1(1x1) -> norm2+relu -> conv2(3x3), two kernels total."""
    s1, b1 = _fold_bn(lp["norm1"])
    s2, b2 = _fold_bn(lp["norm2"])
    N, H, W, C = x.shape
    y = pallas_matmul_fused(x.reshape(N * H * W, C), lp["conv1"].reshape(C, -1),
                            scale_in=s1, bias_in=b1, act_in="relu",
                            scale_out=s2, bias_out=b2, act_out="relu")
    y = y.reshape(N, H, W, -1)
    return conv3x3_same(y, lp["conv2"])


def _transition(x, tp):
    """norm+relu -> conv(1x1) -> avgpool(2,2); BN+ReLU fused as matmul prologue."""
    s, b = _fold_bn(tp["norm"])
    N, H, W, C = x.shape
    y = pallas_matmul_fused(x.reshape(N * H * W, C), tp["conv"].reshape(C, -1),
                            scale_in=s, bias_in=b, act_in="relu")
    y = y.reshape(N, H, W, -1)
    return avgpool_2x2_s2(y)


def densenet121_forward(params, x_nchw):
    # NCHW (PyTorch) -> NHWC (internal, bf16)
    x = jnp.transpose(x_nchw, (0, 2, 3, 1)).astype(jnp.bfloat16)

    # stem: conv7x7/s2 (+ fused BN+ReLU) -> maxpool3x3/s2
    x = _conv_stem(x, params["conv0"], params["norm0"])
    x = maxpool_3x3_s2_p1(x)

    # dense blocks + transitions
    for bi, layers in enumerate(params["blocks"]):
        for lp in layers:
            y = _dense_layer(x, lp)
            x = jnp.concatenate([x, y], axis=-1)
        if bi < len(params["transitions"]):
            x = _transition(x, params["transitions"][bi])

    # norm5 + relu, adaptive avg pool (1,1), flatten
    s5, b5 = _fold_bn(params["norm5"])
    N, H, W, C = x.shape
    x = pallas_affine_act(x.reshape(N * H * W, C), s5, b5, "relu").reshape(N, H, W, C)
    feat = global_avgpool(x)                                  # (N, 1024) f32

    # classifier: Linear(1024, out_size) + Sigmoid, bias+sigmoid fused in the epilogue
    out = pallas_matmul_fused(feat, params["classifier_w"],
                              bias_out=params["classifier_b"], act_out="sigmoid",
                              out_dtype=jnp.float32)
    return out


if __name__ == "__main__":
    key = jax.random.PRNGKey(0)
    k_param, k_x = jax.random.split(key)

    out_size = 14                                   # CheXNet: 14 pathology classes
    params = init_densenet121_params(k_param, out_size)

    # small input consistent with the module: NCHW, 3 channels, 32x32 spatial
    x = jax.random.normal(k_x, (2, 3, 32, 32), jnp.float32)

    y = densenet121_forward(params, x)
    y = jax.block_until_ready(y)

    assert y.shape == (2, out_size), y.shape
    assert bool(jnp.all((y >= 0.0) & (y <= 1.0)))   # sigmoid output range
    print("KERNEL_OK")
</pallas_src>

<mosaic_0001>
module attributes {stable_mosaic.version = 11 : i64} {
  func.func @_mm_kernel(%arg0: i32, %arg1: i32, %arg2: i32, %arg3: memref<256x256xbf16, #tpu.memory_space<vmem>>, %arg4: memref<256x128xbf16, #tpu.memory_space<vmem>>, %arg5: memref<1x256xf32, #tpu.memory_space<vmem>>, %arg6: memref<1x256xf32, #tpu.memory_space<vmem>>, %arg7: memref<1x128xf32, #tpu.memory_space<vmem>>, %arg8: memref<1x128xf32, #tpu.memory_space<vmem>>, %arg9: memref<256x128xbf16, #tpu.memory_space<vmem>>, %arg10: memref<256x128xf32, #tpu.memory_space<vmem>>) attributes {dimension_semantics = [#tpu.dimension_semantics<parallel>, #tpu.dimension_semantics<parallel>, #tpu.dimension_semantics<arbitrary>], iteration_bounds = array<i64: 2, 1, 1>, scalar_prefetch = 0 : i64, scratch_operands = 1 : i64, tpu.core_type = #tpu.core_type<tc>, window_params = [{transform_indices = @transform_0, window_bounds = array<i64: 256, 256>}, {transform_indices = @transform_1, window_bounds = array<i64: 256, 128>}, {transform_indices = @transform_2, window_bounds = array<i64: 1, 256>}, {transform_indices = @transform_3, window_bounds = array<i64: 1, 256>}, {transform_indices = @transform_4, window_bounds = array<i64: 1, 128>}, {transform_indices = @transform_5, window_bounds = array<i64: 1, 128>}, {transform_indices = @transform_6, window_bounds = array<i64: 256, 128>}]} {
    %c0_i32 = arith.constant 0 : i32
    %0 = arith.cmpi eq, %arg2, %c0_i32 : i32
    %1 = arith.extui %0 : i1 to i32
    %c0_i32_0 = arith.constant 0 : i32
    %2 = arith.cmpi ne, %1, %c0_i32_0 : i32
    scf.if %2 {
      %cst_10 = arith.constant 0.000000e+00 : f32
      %12 = vector.broadcast %cst_10 : f32 to vector<256x128xf32>
      %c0_11 = arith.constant 0 : index
      %c0_12 = arith.constant 0 : index
      %13 = vector.load %arg10[%c0_11, %c0_12] : memref<256x128xf32, #tpu.memory_space<vmem>>, vector<256x128xf32>
      tpu.vector_store %arg10[%c0_11, %c0_12], %12 {strides = array<i32>} : memref<256x128xf32, #tpu.memory_space<vmem>>, vector<256x128xf32>,
    } else {
    }
    %c0 = arith.constant 0 : index
    %c0_1 = arith.constant 0 : index
    %3 = vector.load %arg3[%c0, %c0_1] : memref<256x256xbf16, #tpu.memory_space<vmem>>, vector<256x256xbf16>
    %c0_2 = arith.constant 0 : index
    %c0_3 = arith.constant 0 : index
    %4 = vector.load %arg10[%c0_2, %c0_3] : memref<256x128xf32, #tpu.memory_space<vmem>>, vector<256x128xf32>
    %c0_4 = arith.constant 0 : index
    %c0_5 = arith.constant 0 : index
    %5 = vector.load %arg4[%c0_4, %c0_5] : memref<256x128xbf16, #tpu.memory_space<vmem>>, vector<256x128xbf16>
    %cst = arith.constant dense<0.000000e+00> : vector<256x128xf32>
    %6 = tpu.matmul %3, %5, %cst {dimension_numbers = #tpu.dot_dimension_numbers<[1], [0], [0], [1], [0, 0, 1, 1], [], []>} : vector<256x256xbf16>, vector<256x128xbf16>, vector<256x128xf32> -> vector<256x128xf32>
    %7 = arith.addf %4, %6 : vector<256x128xf32>
    %c0_6 = arith.constant 0 : index
    %c0_7 = arith.constant 0 : index
    %8 = vector.load %arg10[%c0_6, %c0_7] : memref<256x128xf32, #tpu.memory_space<vmem>>, vector<256x128xf32>
    tpu.vector_store %arg10[%c0_6, %c0_7], %7 {strides = array<i32>} : memref<256x128xf32, #tpu.memory_space<vmem>>, vector<256x128xf32>,
    %c0_i32_8 = arith.constant 0 : i32
    %9 = arith.cmpi eq, %arg2, %c0_i32_8 : i32
    %10 = arith.extui %9 : i1 to i32
    %c0_i32_9 = arith.constant 0 : i32
    %11 = arith.cmpi ne, %10, %c0_i32_9 : i32
    scf.if %11 {
      %c0_10 = arith.constant 0 : index
      %c0_11 = arith.constant 0 : index
      %12 = vector.load %arg10[%c0_10, %c0_11] : memref<256x128xf32, #tpu.memory_space<vmem>>, vector<256x128xf32>
      %c0_12 = arith.constant 0 : index
      %c0_13 = arith.constant 0 : index
      %13 = vector.load %arg7[%c0_12, %c0_13] : memref<1x128xf32, #tpu.memory_space<vmem>>, vector<1x128xf32>
      %14 = vector.broadcast %13 : vector<1x128xf32> to vector<256x128xf32>
      %15 = arith.mulf %12, %14 : vector<256x128xf32>
      %c0_14 = arith.constant 0 : index
      %c0_15 = arith.constant 0 : index
      %16 = vector.load %arg8[%c0_14, %c0_15] : memref<1x128xf32, #tpu.memory_space<vmem>>, vector<1x128xf32>
      %17 = vector.broadcast %16 : vector<1x128xf32> to vector<256x128xf32>
      %18 = arith.addf %15, %17 : vector<256x128xf32>
      %cst_16 = arith.constant 0.000000e+00 : f32
      %19 = vector.broadcast %cst_16 : f32 to vector<256x128xf32>
      %20 = arith.maximumf %18, %19 : vector<256x128xf32>
      %21 = arith.truncf %20 : vector<256x128xf32> to vector<256x128xbf16>
      %c0_17 = arith.constant 0 : index
      %c0_18 = arith.constant 0 : index
      %22 = vector.load %arg9[%c0_17, %c0_18] : memref<256x128xbf16, #tpu.memory_space<vmem>>, vector<256x128xbf16>
      tpu.vector_store %arg9[%c0_17, %c0_18], %21 {strides = array<i32>} : memref<256x128xbf16, #tpu.memory_space<vmem>>, vector<256x128xbf16>,
    } else {
    }
    return
  }
  func.func @transform_0(%arg0: i32, %arg1: i32, %arg2: i32) -> (i32, i32) {
    %c0_i32 = arith.constant 0 : i32
    return %arg0, %arg2 : i32, i32
  }
  func.func @transform_1(%arg0: i32, %arg1: i32, %arg2: i32) -> (i32, i32) {
    %c0_i32 = arith.constant 0 : i32
    return %arg2, %arg1 : i32, i32
  }
  func.func @transform_2(%arg0: i32, %arg1: i32, %arg2: i32) -> (i32, i32) {
    %c0_i32 = arith.constant 0 : i32
    %c0_i32_0 = arith.constant 0 : i32
    return %c0_i32, %arg2 : i32, i32
  }
  func.func @transform_3(%arg0: i32, %arg1: i32, %arg2: i32) -> (i32, i32) {
    %c0_i32 = arith.constant 0 : i32
    %c0_i32_0 = arith.constant 0 : i32
    return %c0_i32, %arg2 : i32, i32
  }
  func.func @transform_4(%arg0: i32, %arg1: i32, %arg2: i32) -> (i32, i32) {
    %c0_i32 = arith.constant 0 : i32
    %c0_i32_0 = arith.constant 0 : i32
    return %c0_i32, %arg1 : i32, i32
  }
  func.func @transform_5(%arg0: i32, %arg1: i32, %arg2: i32) -> (i32, i32) {
    %c0_i32 = arith.constant 0 : i32
    %c0_i32_0 = arith.constant 0 : i32
    return %c0_i32, %arg1 : i32, i32
  }
  func.func @transform_6(%arg0: i32, %arg1: i32, %arg2: i32) -> (i32, i32) {
    %c0_i32 = arith.constant 0 : i32
    return %arg0, %arg1 : i32, i32
  }
}

</mosaic_0001>

<llo_original>
// kernel: tpu_custom_call.1
$region0: #{tpu_custom_call.1}
  #allocation0 [shape = 'u32[]', space=smem, size = 0x4, offset = 0x4, fixed_abs, tag = 'smem constant byte address 0x4 - core index']
  #allocation1 [shape = 'u32[144,128]{1,0:T(1,128)}', space=vmem, size = 0x12000, scoped, tag = 'internal scratch']
  #allocation2 [shape = 'f32[256,128]{1,0:T(8,128)}', space=vmem, size = 0x20000, scoped, tag = 'scratch operand']
  %s0 = inlined_call_operand.hbm [shape: bf16[512,256], index: 0, kind: input, shape index: {}]
  %s1 = inlined_call_operand.hbm [shape: bf16[256,128], index: 1, kind: input, shape index: {}]
  %s2 = inlined_call_operand.vmem [shape: f32[1,256], index: 2, kind: input, shape index: {}]
  %s3 = inlined_call_operand.vmem [shape: f32[1,256], index: 3, kind: input, shape index: {}]
  %s4 = inlined_call_operand.vmem [shape: f32[1,128], index: 4, kind: input, shape index: {}]
  %s5 = inlined_call_operand.vmem [shape: f32[1,128], index: 5, kind: input, shape index: {}]
  %s6 = inlined_call_operand.hbm [shape: bf16[512,128], index: 6, kind: output, shape index: {}]
  %s7 = sld [smem:[#allocation0]]
  $region73: #{tpu_custom_call.1} parent=0
    _
  %s9 = ssub.s32 1, %s7
  %s10 = scalar_select 0, %s9, %s7
  $region1: #{tpu_custom_call.1} parent=0
    #allocation3 [shape = 'u8[262144]{0}', space=vmem, size = 0x40000, scoped, tag = 'input window, operand 0']
    #allocation4 [shape = 's32[2]{0}', space=sflag, size = 0x8, scoped, tag = 'scoped memory for tpu_custom_call.1']
    #allocation5 [shape = 's32[2]{0}', space=sflag, size = 0x8, scoped, tag = 'scoped memory for tpu_custom_call.1']
    #allocation6 [shape = 'u8[65536]{0}', space=vmem, size = 0x10000, scoped, tag = 'input window, operand 1, single buffered']
    #allocation7 [shape = 's32[1]{0}', space=sflag, size = 0x4, scoped, tag = 'scoped memory for tpu_custom_call.1']
    #allocation8 [shape = 'u8[131072]{0}', space=vmem, size = 0x20000, scoped, tag = 'output window, operand 0']
    %11 = vsyncpa [#allocation4], 0
    %s12 = scalar_lea.sflag [#allocation4], 1
    %13 = vsyncpa %s12, 0
    %14 = vsyncpa [#allocation7], 0
    %15 = vsyncpa [#allocation5], 0
    %s16 = scalar_lea.sflag [#allocation5], 1
    %17 = vsyncpa %s16, 0
    loop: start=0, step=1, limit=4
    $region2: #{tpu_custom_call.1} parent=1 // loop_pre_header
      _
    $region3: #{tpu_custom_call.1} parent=1 // loop_header
      %s19 = sphi 0, %s23
      %p20 = scmp.ge.s32.totalorder %s19, 4
      %s26 = sphi 0, %s45
      %s27 = sphi 0, %s41
      %s28 = sphi 0, %s37
      %s29 = sphi 0, %s26
      %s30 = sphi 0, %s27
      %s31 = sphi 0, %s28
      %s32 = sphi 0, %s29
      %s33 = sphi 0, %s30
      %s34 = sphi 0, %s31
      %s50 = sphi 0, %s52
      %s53 = sphi 0, %s50
      %s54 = sphi 0, %s53
      %s70 = sphi 0, %s54
      %s78 = sphi 0, %s80
      %s81 = sphi 0, %s78
      %s82 = sphi 0, %s81
      %s98 = sphi 0, %s82
      %s104 = sphi 0, %s106
      %s107 = sphi 0, %s104
      %s108 = sphi 0, %s107
      %s124 = sphi 0, %s108
      %s130 = sphi 0, %s132
      %s133 = sphi 0, %s130
      %s134 = sphi 0, %s133
      %s150 = sphi 0, %s134
      %s156 = sphi 0, %s158
      %s159 = sphi 0, %s156
      %s160 = sphi 0, %s159
      %s176 = sphi 0, %s160
      %s182 = sphi 0, %s184
      %s185 = sphi 0, %s182
      %s186 = sphi 0, %s185
      %s202 = sphi 0, %s186
      %s210 = sphi 0, %s212
      %s213 = sphi 0, %s210
      %s214 = sphi 0, %s213
      %s230 = sphi 0, %s214
    $region4: #{tpu_custom_call.1} parent=1 // loop_header_branch
      %22 = sbr.rel (%p20) target = $region8
    $region5: #{tpu_custom_call.1} parent=1 // loop_body
      %s24 = ssub.s32 %s19, 1
      %s25 = ssub.s32 %s19, 2
      %s35 = sadd.s32 1, %s28
      %p36 = scmp.ge.s32.totalorder %s35, 1
      %s37 = scalar_select %p36, 0, %s35
      %s38 = sadd.s32 1, %s27
      %s39 = scalar_select %p36, %s38, %s27
      %p40 = scmp.ge.s32.totalorder %s39, 1
      %s41 = scalar_select %p40, 0, %s39
      %s42 = sadd.s32 1, %s26
      %s43 = scalar_select %p40, %s42, %s26
      %p44 = scmp.ge.s32.totalorder %s43, 2
      %s45 = scalar_select %p44, 0, %s43
      %s46 = ssub.s32 %s26, %s45
      %s47 = ssub.s32 %s28, %s37
      %s48 = sor.u32 %s46, %s47
      %p49 = scmp.eq.s32.totalorder %s48, 0
      %s51 = sadd.s32 %s50, 1
      %s52 = scalar_select %p49, %s50, %s51
      %p55 = pneg %p49
      %p56 = scmp.eq.s32.totalorder %s19, 1
      %p57 = por %p55, %p56
      %p58 = scmp.ne.s32.totalorder %s50, %s53
      %p59 = scmp.eq.s32.totalorder %s19, 0
      %p60 = por %p58, %p59
      %p61 = scmp.ne.s32.totalorder %s50, %s53
      %p62 = scmp.eq.s32.totalorder %s24, 1
      %p63 = por %p61, %p62
      %p64 = scmp.ne.s32.totalorder %s53, %s54
      %p65 = scmp.eq.s32.totalorder %s24, 0
      %p66 = por %p64, %p65
      %p67 = scmp.ne.s32.totalorder %s53, %s54
      %p68 = scmp.eq.s32.totalorder %s25, 1
      %p69 = por %p67, %p68
      %p71 = scmp.ne.s32.totalorder %s54, %s70
      %p72 = scmp.eq.s32.totalorder %s25, 0
      %p73 = por %p71, %p72
      %s74 = ssub.s32 %s28, %s37
      %s75 = ssub.s32 %s27, %s41
      %s76 = sor.u32 %s74, %s75
      %p77 = scmp.eq.s32.totalorder %s76, 0
      %s79 = sadd.s32 %s78, 1
      %s80 = scalar_select %p77, %s78, %s79
      %p83 = pneg %p77
      %p84 = scmp.eq.s32.totalorder %s19, 1
      %p85 = por %p83, %p84
      %p86 = scmp.ne.s32.totalorder %s78, %s81
      %p87 = scmp.eq.s32.totalorder %s19, 0
      %p88 = por %p86, %p87
      %p89 = scmp.ne.s32.totalorder %s78, %s81
      %p90 = scmp.eq.s32.totalorder %s24, 1
      %p91 = por %p89, %p90
      %p92 = scmp.ne.s32.totalorder %s81, %s82
      %p93 = scmp.eq.s32.totalorder %s24, 0
      %p94 = por %p92, %p93
      %p95 = scmp.ne.s32.totalorder %s81, %s82
      %p96 = scmp.eq.s32.totalorder %s25, 1
      %p97 = por %p95, %p96
      %p99 = scmp.ne.s32.totalorder %s82, %s98
      %p100 = scmp.eq.s32.totalorder %s25, 0
      %p101 = por %p99, %p100
      %s102 = ssub.s32 %s28, %s37
      %p103 = scmp.eq.s32.totalorder %s102, 0
      %s105 = sadd.s32 %s104, 1
      %s106 = scalar_select %p103, %s104, %s105
      %p109 = pneg %p103
      %p110 = scmp.eq.s32.totalorder %s19, 1
      %p111 = por %p109, %p110
      %p112 = scmp.ne.s32.totalorder %s104, %s107
      %p113 = scmp.eq.s32.totalorder %s19, 0
      %p114 = por %p112, %p113
      %p115 = scmp.ne.s32.totalorder %s104, %s107
      %p116 = scmp.eq.s32.totalorder %s24, 1
      %p117 = por %p115, %p116
      %p118 = scmp.ne.s32.totalorder %s107, %s108
      %p119 = scmp.eq.s32.totalorder %s24, 0
      %p120 = por %p118, %p119
      %p121 = scmp.ne.s32.totalorder %s107, %s108
      %p122 = scmp.eq.s32.totalorder %s25, 1
      %p123 = por %p121, %p122
      %p125 = scmp.ne.s32.totalorder %s108, %s124
      %p126 = scmp.eq.s32.totalorder %s25, 0
      %p127 = por %p125, %p126
      %s128 = ssub.s32 %s28, %s37
      %p129 = scmp.eq.s32.totalorder %s128, 0
      %s131 = sadd.s32 %s130, 1
      %s132 = scalar_select %p129, %s130, %s131
      %p135 = pneg %p129
      %p136 = scmp.eq.s32.totalorder %s19, 1
      %p137 = por %p135, %p136
      %p138 = scmp.ne.s32.totalorder %s130, %s133
      %p139 = scmp.eq.s32.totalorder %s19, 0
      %p140 = por %p138, %p139
      %p141 = scmp.ne.s32.totalorder %s130, %s133
      %p142 = scmp.eq.s32.totalorder %s24, 1
      %p143 = por %p141, %p142
      %p144 = scmp.ne.s32.totalorder %s133, %s134
      %p145 = scmp.eq.s32.totalorder %s24, 0
      %p146 = por %p144, %p145
      %p147 = scmp.ne.s32.totalorder %s133, %s134
      %p148 = scmp.eq.s32.totalorder %s25, 1
      %p149 = por %p147, %p148
      %p151 = scmp.ne.s32.totalorder %s134, %s150
      %p152 = scmp.eq.s32.totalorder %s25, 0
      %p153 = por %p151, %p152
      %s154 = ssub.s32 %s27, %s41
      %p155 = scmp.eq.s32.totalorder %s154, 0
      %s157 = sadd.s32 %s156, 1
      %s158 = scalar_select %p155, %s156, %s157
      %p161 = pneg %p155
      %p162 = scmp.eq.s32.totalorder %s19, 1
      %p163 = por %p161, %p162
      %p164 = scmp.ne.s32.totalorder %s156, %s159
      %p165 = scmp.eq.s32.totalorder %s19, 0
      %p166 = por %p164, %p165
      %p167 = scmp.ne.s32.totalorder %s156, %s159
      %p168 = scmp.eq.s32.totalorder %s24, 1
      %p169 = por %p167, %p168
      %p170 = scmp.ne.s32.totalorder %s159, %s160
      %p171 = scmp.eq.s32.totalorder %s24, 0
      %p172 = por %p170, %p171
      %p173 = scmp.ne.s32.totalorder %s159, %s160
      %p174 = scmp.eq.s32.totalorder %s25, 1
      %p175 = por %p173, %p174
      %p177 = scmp.ne.s32.totalorder %s160, %s176
      %p178 = scmp.eq.s32.totalorder %s25, 0
      %p179 = por %p177, %p178
      %s180 = ssub.s32 %s27, %s41
      %p181 = scmp.eq.s32.totalorder %s180, 0
      %s183 = sadd.s32 %s182, 1
      %s184 = scalar_select %p181, %s182, %s183
      %p187 = pneg %p181
      %p188 = scmp.eq.s32.totalorder %s19, 1
      %p189 = por %p187, %p188
      %p190 = scmp.ne.s32.totalorder %s182, %s185
      %p191 = scmp.eq.s32.totalorder %s19, 0
      %p192 = por %p190, %p191
      %p193 = scmp.ne.s32.totalorder %s182, %s185
      %p194 = scmp.eq.s32.totalorder %s24, 1
      %p195 = por %p193, %p194
      %p196 = scmp.ne.s32.totalorder %s185, %s186
      %p197 = scmp.eq.s32.totalorder %s24, 0
      %p198 = por %p196, %p197
      %p199 = scmp.ne.s32.totalorder %s185, %s186
      %p200 = scmp.eq.s32.totalorder %s25, 1
      %p201 = por %p199, %p200
      %p203 = scmp.ne.s32.totalorder %s186, %s202
      %p204 = scmp.eq.s32.totalorder %s25, 0
      %p205 = por %p203, %p204
      %s206 = ssub.s32 %s26, %s45
      %s207 = ssub.s32 %s27, %s41
      %s208 = sor.u32 %s206, %s207
      %p209 = scmp.eq.s32.totalorder %s208, 0
      %s211 = sadd.s32 %s210, 1
      %s212 = scalar_select %p209, %s210, %s211
      %p215 = pneg %p209
      %p216 = scmp.eq.s32.totalorder %s19, 1
      %p217 = por %p215, %p216
      %p218 = scmp.ne.s32.totalorder %s210, %s213
      %p219 = scmp.eq.s32.totalorder %s19, 0
      %p220 = por %p218, %p219
      %p221 = scmp.ne.s32.totalorder %s210, %s213
      %p222 = scmp.eq.s32.totalorder %s24, 1
      %p223 = por %p221, %p222
      %p224 = scmp.ne.s32.totalorder %s213, %s214
      %p225 = scmp.eq.s32.totalorder %s24, 0
      %p226 = por %p224, %p225
      %p227 = scmp.ne.s32.totalorder %s213, %s214
      %p228 = scmp.eq.s32.totalorder %s25, 1
      %p229 = por %p227, %p228
      %p231 = scmp.ne.s32.totalorder %s214, %s230
      %p232 = scmp.eq.s32.totalorder %s25, 0
      %p233 = por %p231, %p232
      %p234 = scmp.le.s32.totalorder 1, %s19
      %p235 = scmp.lt.s32.totalorder %s19, 3
      %p236 = pnand %p234, %p235
      %p237 = pneg %p236
      // Predicated region
      $region9: #{tpu_custom_call.1} parent=5 // pred_check
        _
      $region10: #{tpu_custom_call.1} parent=5 // pred_check_branch
        %239 = sbr.rel (%p236) target = $region12
      $region11: #{tpu_custom_call.1} parent=5 // pred_region
        %s240 = ssub.s32 %s19, 1
        // Predicated region
        $region13: #{tpu_custom_call.1} parent=11 // pred_check
          %p241 = pneg %p94
        $region14: #{tpu_custom_call.1} parent=11 // pred_check_branch
          %243 = sbr.rel (%p241) target = $region16
        $region15: #{tpu_custom_call.1} parent=11 // pred_region
          %s244 = smul.u32 32, %s31
          %s246 = ssub.s32 2048, 2048
          %247 = vsyncadd [#allocation7], %s246
          %s248 = sadd.s32 %s30, %s244
          %s249 = smul.addr %s248, 64
          %s250 = scalar_lea.hbm %s1, %s249
          %s251 = sshll.u32 [#allocation6], 4
          %s252 = int_to_ptr.vmem [resolvable:$true] %s251
          %257 = dma.hbm_to_vmem [thread:$0]  %s250, 2048, %s252, [#allocation7], 64, 64, 4
        $region16: #{tpu_custom_call.1} parent=11 // pred_fallthru
          _
        // Predicated region
        $region17: #{tpu_custom_call.1} parent=11 // pred_check
          %p258 = pneg %p120
        $region18: #{tpu_custom_call.1} parent=11 // pred_check_branch
          %260 = sbr.rel (%p258) target = $region20
        $region19: #{tpu_custom_call.1} parent=11 // pred_region
          %s261 = smul.u32 2, %s31
          %p262 = scmp.lt.s32.totalorder %s261, 1
          %s263 = scalar_select %p262, %s261, 1
          %s264 = scalar_lea.vmem %s2, %s263
          %s265 = smul.u32 2, %s31
        $region20: #{tpu_custom_call.1} parent=11 // pred_fallthru
          _
        // Predicated region
        $region21: #{tpu_custom_call.1} parent=11 // pred_check
          %p266 = pneg %p146
        $region22: #{tpu_custom_call.1} parent=11 // pred_check_branch
          %268 = sbr.rel (%p266) target = $region24
        $region23: #{tpu_custom_call.1} parent=11 // pred_region
          %s269 = smul.u32 2, %s31
          %p270 = scmp.lt.s32.totalorder %s269, 1
          %s271 = scalar_select %p270, %s269, 1
          %s272 = scalar_lea.vmem %s3, %s271
          %s273 = smul.u32 2, %s31
        $region24: #{tpu_custom_call.1} parent=11 // pred_fallthru
          _
        // Predicated region
        $region25: #{tpu_custom_call.1} parent=11 // pred_check
          %p274 = pneg %p172
        $region26: #{tpu_custom_call.1} parent=11 // pred_check_branch
          %276 = sbr.rel (%p274) target = $region28
        $region27: #{tpu_custom_call.1} parent=11 // pred_region
          %p277 = scmp.lt.s32.totalorder %s30, 0
          %s278 = scalar_select %p277, %s30, 0
          %s279 = scalar_lea.vmem %s4, %s278
        $region28: #{tpu_custom_call.1} parent=11 // pred_fallthru
          _
        // Predicated region
        $region29: #{tpu_custom_call.1} parent=11 // pred_check
          %p280 = pneg %p198
        $region30: #{tpu_custom_call.1} parent=11 // pred_check_branch
          %282 = sbr.rel (%p280) target = $region32
        $region31: #{tpu_custom_call.1} parent=11 // pred_region
          %p283 = scmp.lt.s32.totalorder %s30, 0
          %s284 = scalar_select %p283, %s30, 0
          %s285 = scalar_lea.vmem %s5, %s284
        $region32: #{tpu_custom_call.1} parent=11 // pred_fallthru
          _
      $region12: #{tpu_custom_call.1} parent=5 // pred_fallthru
        _
      %p286 = scmp.lt.s32.totalorder %s19, 2
      // Predicated region
      $region33: #{tpu_custom_call.1} parent=5 // pred_check
        %p287 = pneg %p286
      $region34: #{tpu_custom_call.1} parent=5 // pred_check_branch
        %289 = sbr.rel (%p287) target = $region36
      $region35: #{tpu_custom_call.1} parent=5 // pred_region
        // Predicated region
        $region37: #{tpu_custom_call.1} parent=35 // pred_check
          %p290 = pneg %p60
        $region38: #{tpu_custom_call.1} parent=35 // pred_check_branch
          %292 = sbr.rel (%p290) target = $region40
        $region39: #{tpu_custom_call.1} parent=35 // pred_region
          %s293 = sand.u32 %s50, 1
          %s294 = scalar_lea.sflag [#allocation4], %s293
          %s295 = sand.u32 %s50, 1
          %s296 = smul.addr %s295, 256
          %s297 = scalar_lea.vmem [#allocation3], %s296
          %s298 = smul.u32 32, %s26
          %s299 = smul.u32 2, %s28
          %s301 = ssub.s32 4096, 4096
          %302 = vsyncadd %s294, %s301
          %s303 = smul.addr %s298, 2
          %s304 = sadd.s32 %s299, %s303
          %s305 = smul.addr %s304, 64
          %s306 = scalar_lea.hbm %s0, %s305
          %s307 = sshll.u32 %s297, 4
          %s308 = int_to_ptr.vmem [resolvable:$true] %s307
          %313 = dma.hbm_to_vmem [thread:$0]  %s306, 4096, %s308, %s294, 128, 128, 8
        $region40: #{tpu_custom_call.1} parent=35 // pred_fallthru
          _
      $region36: #{tpu_custom_call.1} parent=5 // pred_fallthru
        _
      %p314 = scmp.le.s32.totalorder 1, %s19
      %p315 = scmp.lt.s32.totalorder %s19, 3
      %p316 = pnand %p314, %p315
      %p317 = pneg %p316
      // Predicated region
      $region41: #{tpu_custom_call.1} parent=5 // pred_check
        _
      $region42: #{tpu_custom_call.1} parent=5 // pred_check_branch
        %319 = sbr.rel (%p316) target = $region44
      $region43: #{tpu_custom_call.1} parent=5 // pred_region
        %s320 = ssub.s32 %s19, 1
        %s321 = sand.u32 %s53, 1
        %s322 = scalar_lea.sflag [#allocation4], %s321
        %s323 = sand.u32 %s53, 1
        %s324 = smul.addr %s323, 256
        %s325 = scalar_lea.vmem [#allocation3], %s324
        // Predicated region
        $region45: #{tpu_custom_call.1} parent=43 // pred_check
          %p326 = pneg %p66
        $region46: #{tpu_custom_call.1} parent=43 // pred_check_branch
          %328 = sbr.rel (%p326) target = $region48
        $region47: #{tpu_custom_call.1} parent=43 // pred_region
          %329 = dma.done %s322, 4096
        $region48: #{tpu_custom_call.1} parent=43 // pred_fallthru
          _
        // Predicated region
        $region49: #{tpu_custom_call.1} parent=43 // pred_check
          %p330 = pneg %p94
        $region50: #{tpu_custom_call.1} parent=43 // pred_check_branch
          %332 = sbr.rel (%p330) target = $region52
        $region51: #{tpu_custom_call.1} parent=43 // pred_region
          %333 = dma.done [#allocation7], 2048
        $region52: #{tpu_custom_call.1} parent=43 // pred_fallthru
          _
        %s334 = sand.u32 %s53, 1
        %s335 = scalar_lea.sflag [#allocation4], %s334
        %s336 = sand.u32 %s53, 1
        %s337 = smul.addr %s336, 256
        %s338 = scalar_lea.vmem [#allocation3], %s337
        %p339 = pneg %p66
        %p340 = pneg %p63
        %p341 = pneg %p94
        %p342 = pneg %p91
        %s343 = smul.u32 2, %s31
        %p344 = scmp.lt.s32.totalorder %s343, 1
        %s345 = scalar_select %p344, %s343, 1
        %s346 = scalar_lea.vmem %s2, %s345
        %p347 = pneg %p120
        %p348 = pneg %p117
        %s349 = smul.u32 2, %s31
        %p350 = scmp.lt.s32.totalorder %s349, 1
        %s351 = scalar_select %p350, %s349, 1
        %s352 = scalar_lea.vmem %s3, %s351
        %p353 = pneg %p146
        %p354 = pneg %p143
        %p355 = scmp.lt.s32.totalorder %s30, 0
        %s356 = scalar_select %p355, %s30, 0
        %s357 = scalar_lea.vmem %s4, %s356
        %p358 = pneg %p172
        %p359 = pneg %p169
        %p360 = scmp.lt.s32.totalorder %s30, 0
        %s361 = scalar_select %p360, %s30, 0
        %s362 = scalar_lea.vmem %s5, %s361
        %p363 = pneg %p198
        %p364 = pneg %p195
        %p365 = pneg %p226
        %p366 = pneg %p223
        %s367 = sand.u32 %s213, 1
        %s368 = scalar_lea.sflag [#allocation5], %s367
        %s369 = sand.u32 %s213, 1
        %s370 = smul.addr %s369, 128
        %s371 = scalar_lea.vmem [#allocation8], %s370
        %s372 = smul.u32 32, %s29
        %s373 = smul.u32 2, %s31
        %s374 = smul.u32 32, %s31
        %s375 = smul.u32 2, %s31
        %p376 = scmp.lt.s32.totalorder %s375, 1
        %s377 = scalar_select %p376, %s375, 1
        %s378 = scalar_lea.vmem %s2, %s377
        %s379 = smul.u32 2, %s31
        %s380 = smul.u32 2, %s31
        %p381 = scmp.lt.s32.totalorder %s380, 1
        %s382 = scalar_select %p381, %s380, 1
        %s383 = scalar_lea.vmem %s3, %s382
        %s384 = smul.u32 2, %s31
        %p385 = scmp.lt.s32.totalorder %s30, 0
        %s386 = scalar_select %p385, %s30, 0
        %s387 = scalar_lea.vmem %s4, %s386
        %p388 = scmp.lt.s32.totalorder %s30, 0
        %s389 = scalar_select %p388, %s30, 0
        %s390 = scalar_lea.vmem %s5, %s389
        %s391 = smul.u32 32, %s29
        %p393 = scmp.eq.s32.totalorder %s31, 0
        // Predicated region
        $region53: #{tpu_custom_call.1} parent=43 // pred_check
          %p394 = pneg %p393
        $region54: #{tpu_custom_call.1} parent=43 // pred_check_branch
          %396 = sbr.rel (%p394) target = $region56
        $region55: #{tpu_custom_call.1} parent=43 // pred_region
          %397 = vst [vmem:[#allocation2] sm:$0xff] 0.0
          %398 = vst [vmem:[#allocation2 + $0x8] sm:$0xff] 0.0
          %399 = vst [vmem:[#allocation2 + $0x10] sm:$0xff] 0.0
          %400 = vst [vmem:[#allocation2 + $0x18] sm:$0xff] 0.0
          %401 = vst [vmem:[#allocation2 + $0x20] sm:$0xff] 0.0
          %402 = vst [vmem:[#allocation2 + $0x28] sm:$0xff] 0.0
          %403 = vst [vmem:[#allocation2 + $0x30] sm:$0xff] 0.0
          %404 = vst [vmem:[#allocation2 + $0x38] sm:$0xff] 0.0
          %405 = vst [vmem:[#allocation2 + $0x40] sm:$0xff] 0.0
          %406 = vst [vmem:[#allocation2 + $0x48] sm:$0xff] 0.0
          %407 = vst [vmem:[#allocation2 + $0x50] sm:$0xff] 0.0
          %408 = vst [vmem:[#allocation2 + $0x58] sm:$0xff] 0.0
          %409 = vst [vmem:[#allocation2 + $0x60] sm:$0xff] 0.0
          %410 = vst [vmem:[#allocation2 + $0x68] sm:$0xff] 0.0
          %411 = vst [vmem:[#allocation2 + $0x70] sm:$0xff] 0.0
          %412 = vst [vmem:[#allocation2 + $0x78] sm:$0xff] 0.0
          %413 = vst [vmem:[#allocation2 + $0x80] sm:$0xff] 0.0
          %414 = vst [vmem:[#allocation2 + $0x88] sm:$0xff] 0.0
          %415 = vst [vmem:[#allocation2 + $0x90] sm:$0xff] 0.0
          %416 = vst [vmem:[#allocation2 + $0x98] sm:$0xff] 0.0
          %417 = vst [vmem:[#allocation2 + $0xa0] sm:$0xff] 0.0
          %418 = vst [vmem:[#allocation2 + $0xa8] sm:$0xff] 0.0
          %419 = vst [vmem:[#allocation2 + $0xb0] sm:$0xff] 0.0
          %420 = vst [vmem:[#allocation2 + $0xb8] sm:$0xff] 0.0
          %421 = vst [vmem:[#allocation2 + $0xc0] sm:$0xff] 0.0
          %422 = vst [vmem:[#allocation2 + $0xc8] sm:$0xff] 0.0
          %423 = vst [vmem:[#allocation2 + $0xd0] sm:$0xff] 0.0
          %424 = vst [vmem:[#allocation2 + $0xd8] sm:$0xff] 0.0
          %425 = vst [vmem:[#allocation2 + $0xe0] sm:$0xff] 0.0
          %426 = vst [vmem:[#allocation2 + $0xe8] sm:$0xff] 0.0
          %427 = vst [vmem:[#allocation2 + $0xf0] sm:$0xff] 0.0
          %428 = vst [vmem:[#allocation2 + $0xf8] sm:$0xff] 0.0
        $region56: #{tpu_custom_call.1} parent=43 // pred_fallthru
          _
        %v429 = vld [vmem:[%s325] sm:$0xff]
        %v430 = vld [vmem:[%s325 + $0x8] sm:$0xff]
        %v431 = vld [vmem:[%s325 + $0x10] sm:$0xff]
        %v432 = vld [vmem:[%s325 + $0x18] sm:$0xff]
        %v433 = vld [vmem:[%s325 + $0x20] sm:$0xff]
        %v434 = vld [vmem:[%s325 + $0x28] sm:$0xff]
        %v435 = vld [vmem:[%s325 + $0x30] sm:$0xff]
        %v436 = vld [vmem:[%s325 + $0x38] sm:$0xff]
        %v437 = vld [vmem:[%s325 + $0x40] sm:$0xff]
        %v438 = vld [vmem:[%s325 + $0x48] sm:$0xff]
        %v439 = vld [vmem:[%s325 + $0x50] sm:$0xff]
        %v440 = vld [vmem:[%s325 + $0x58] sm:$0xff]
        %v441 = vld [vmem:[%s325 + $0x60] sm:$0xff]
        %v442 = vld [vmem:[%s325 + $0x68] sm:$0xff]
        %v443 = vld [vmem:[%s325 + $0x70] sm:$0xff]
        %v444 = vld [vmem:[%s325 + $0x78] sm:$0xff]
        %v445 = vld [vmem:[%s325 + $0x80] sm:$0xff]
        %v446 = vld [vmem:[%s325 + $0x88] sm:$0xff]
        %v447 = vld [vmem:[%s325 + $0x90] sm:$0xff]
        %v448 = vld [vmem:[%s325 + $0x98] sm:$0xff]
        %v449 = vld [vmem:[%s325 + $0xa0] sm:$0xff]
        %v450 = vld [vmem:[%s325 + $0xa8] sm:$0xff]
        %v451 = vld [vmem:[%s325 + $0xb0] sm:$0xff]
        %v452 = vld [vmem:[%s325 + $0xb8] sm:$0xff]
        %v453 = vld [vmem:[%s325 + $0xc0] sm:$0xff]
        %v454 = vld [vmem:[%s325 + $0xc8] sm:$0xff]
        %v455 = vld [vmem:[%s325 + $0xd0] sm:$0xff]
        %v456 = vld [vmem:[%s325 + $0xd8] sm:$0xff]
        %v457 = vld [vmem:[%s325 + $0xe0] sm:$0xff]
        %v458 = vld [vmem:[%s325 + $0xe8] sm:$0xff]
        %v459 = vld [vmem:[%s325 + $0xf0] sm:$0xff]
        %v460 = vld [vmem:[%s325 + $0xf8] sm:$0xff]
        %v461 = vld [vmem:[#allocation2] sm:$0xff]
        %v462 = vld [vmem:[#allocation2 + $0x8] sm:$0xff]
        %v463 = vld [vmem:[#allocation2 + $0x10] sm:$0xff]
        %v464 = vld [vmem:[#allocation2 + $0x18] sm:$0xff]
        %v465 = vld [vmem:[#allocation2 + $0x20] sm:$0xff]
        %v466 = vld [vmem:[#allocation2 + $0x28] sm:$0xff]
        %v467 = vld [vmem:[#allocation2 + $0x30] sm:$0xff]
        %v468 = vld [vmem:[#allocation2 + $0x38] sm:$0xff]
        %v469 = vld [vmem:[#allocation2 + $0x40] sm:$0xff]
        %v470 = vld [vmem:[#allocation2 + $0x48] sm:$0xff]
        %v471 = vld [vmem:[#allocation2 + $0x50] sm:$0xff]
        %v472 = vld [vmem:[#allocation2 + $0x58] sm:$0xff]
        %v473 = vld [vmem:[#allocation2 + $0x60] sm:$0xff]
        %v474 = vld [vmem:[#allocation2 + $0x68] sm:$0xff]
        %v475 = vld [vmem:[#allocation2 + $0x70] sm:$0xff]
        %v476 = vld [vmem:[#allocation2 + $0x78] sm:$0xff]
        %v477 = vld [vmem:[#allocation2 + $0x80] sm:$0xff]
        %v478 = vld [vmem:[#allocation2 + $0x88] sm:$0xff]
        %v479 = vld [vmem:[#allocation2 + $0x90] sm:$0xff]
        %v480 = vld [vmem:[#allocation2 + $0x98] sm:$0xff]
        %v481 = vld [vmem:[#allocation2 + $0xa0] sm:$0xff]
        %v482 = vld [vmem:[#allocation2 + $0xa8] sm:$0xff]
        %v483 = vld [vmem:[#allocation2 + $0xb0] sm:$0xff]
        %v484 = vld [vmem:[#allocation2 + $0xb8] sm:$0xff]
        %v485 = vld [vmem:[#allocation2 + $0xc0] sm:$0xff]
        %v486 = vld [vmem:[#allocation2 + $0xc8] sm:$0xff]
        %v487 = vld [vmem:[#allocation2 + $0xd0] sm:$0xff]
        %v488 = vld [vmem:[#allocation2 + $0xd8] sm:$0xff]
        %v489 = vld [vmem:[#allocation2 + $0xe0] sm:$0xff]
        %v490 = vld [vmem:[#allocation2 + $0xe8] sm:$0xff]
        %v491 = vld [vmem:[#allocation2 + $0xf0] sm:$0xff]
        %v492 = vld [vmem:[#allocation2 + $0xf8] sm:$0xff]
        %v493 = vld [vmem:[#allocation6] sm:$0xf]
        %v494 = vld [vmem:[#allocation6 + $0x4] sm:$0xf]
        %v495 = vld [vmem:[#allocation6 + $0x8] sm:$0xf]
        %v496 = vld [vmem:[#allocation6 + $0xc] sm:$0xf]
        %v497 = vld [vmem:[#allocation6 + $0x10] sm:$0xf]
        %v498 = vld [vmem:[#allocation6 + $0x14] sm:$0xf]
        %v499 = vld [vmem:[#allocation6 + $0x18] sm:$0xf]
        %v500 = vld [vmem:[#allocation6 + $0x1c] sm:$0xf]
        %v501 = vld [vmem:[#allocation6 + $0x20] sm:$0xf]
        %v502 = vld [vmem:[#allocation6 + $0x24] sm:$0xf]
        %v503 = vld [vmem:[#allocation6 + $0x28] sm:$0xf]
        %v504 = vld [vmem:[#allocation6 + $0x2c] sm:$0xf]
        %v505 = vld [vmem:[#allocation6 + $0x30] sm:$0xf]
        %v506 = vld [vmem:[#allocation6 + $0x34] sm:$0xf]
        %v507 = vld [vmem:[#allocation6 + $0x38] sm:$0xf]
        %v508 = vld [vmem:[#allocation6 + $0x3c] sm:$0xf]
        %v509 = vld [vmem:[#allocation6 + $0x40] sm:$0xf]
        %v510 = vld [vmem:[#allocation6 + $0x44] sm:$0xf]
        %v511 = vld [vmem:[#allocation6 + $0x48] sm:$0xf]
        %v512 = vld [vmem:[#allocation6 + $0x4c] sm:$0xf]
        %v513 = vld [vmem:[#allocation6 + $0x50] sm:$0xf]
        %v514 = vld [vmem:[#allocation6 + $0x54] sm:$0xf]
        %v515 = vld [vmem:[#allocation6 + $0x58] sm:$0xf]
        %v516 = vld [vmem:[#allocation6 + $0x5c] sm:$0xf]
        %v517 = vld [vmem:[#allocation6 + $0x60] sm:$0xf]
        %v518 = vld [vmem:[#allocation6 + $0x64] sm:$0xf]
        %v519 = vld [vmem:[#allocation6 + $0x68] sm:$0xf]
        %v520 = vld [vmem:[#allocation6 + $0x6c] sm:$0xf]
        %v521 = vld [vmem:[#allocation6 + $0x70] sm:$0xf]
        %v522 = vld [vmem:[#allocation6 + $0x74] sm:$0xf]
        %v523 = vld [vmem:[#allocation6 + $0x78] sm:$0xf]
        %v524 = vld [vmem:[#allocation6 + $0x7c] sm:$0xf]
        %v557 = vunpack.c.l.b16 %v429
        %v558 = vunpack.c.h.b16 %v429
        %v559 = vunpack.c.l.b16 %v430
        %v560 = vunpack.c.h.b16 %v430
        %v561 = vunpack.c.l.b16 %v431
        %v562 = vunpack.c.h.b16 %v431
        %v563 = vunpack.c.l.b16 %v432
        %v564 = vunpack.c.h.b16 %v432
        %v565 = vunpack.c.l.b16 %v433
        %v566 = vunpack.c.h.b16 %v433
        %v567 = vunpack.c.l.b16 %v434
        %v568 = vunpack.c.h.b16 %v434
        %v569 = vunpack.c.l.b16 %v435
        %v570 = vunpack.c.h.b16 %v435
        %v571 = vunpack.c.l.b16 %v436
        %v572 = vunpack.c.h.b16 %v436
        %v573 = vunpack.c.l.b16 %v437
        %v574 = vunpack.c.h.b16 %v437
        %v575 = vunpack.c.l.b16 %v438
        %v576 = vunpack.c.h.b16 %v438
        %v577 = vunpack.c.l.b16 %v439
        %v578 = vunpack.c.h.b16 %v439
        %v579 = vunpack.c.l.b16 %v440
        %v580 = vunpack.c.h.b16 %v440
        %v581 = vunpack.c.l.b16 %v441
        %v582 = vunpack.c.h.b16 %v441
        %v583 = vunpack.c.l.b16 %v442
        %v584 = vunpack.c.h.b16 %v442
        %v585 = vunpack.c.l.b16 %v443
        %v586 = vunpack.c.h.b16 %v443
        %v587 = vunpack.c.l.b16 %v444
        %v588 = vunpack.c.h.b16 %v444
        %v589 = vunpack.c.l.b16 %v445
        %v590 = vunpack.c.h.b16 %v445
        %v591 = vunpack.c.l.b16 %v446
        %v592 = vunpack.c.h.b16 %v446
        %v593 = vunpack.c.l.b16 %v447
        %v594 = vunpack.c.h.b16 %v447
        %v595 = vunpack.c.l.b16 %v448
        %v596 = vunpack.c.h.b16 %v448
        %v597 = vunpack.c.l.b16 %v449
        %v598 = vunpack.c.h.b16 %v449
        %v599 = vunpack.c.l.b16 %v450
        %v600 = vunpack.c.h.b16 %v450
        %v601 = vunpack.c.l.b16 %v451
        %v602 = vunpack.c.h.b16 %v451
        %v603 = vunpack.c.l.b16 %v452
        %v604 = vunpack.c.h.b16 %v452
        %v605 = vunpack.c.l.b16 %v453
        %v606 = vunpack.c.h.b16 %v453
        %v607 = vunpack.c.l.b16 %v454
        %v608 = vunpack.c.h.b16 %v454
        %v609 = vunpack.c.l.b16 %v455
        %v610 = vunpack.c.h.b16 %v455
        %v611 = vunpack.c.l.b16 %v456
        %v612 = vunpack.c.h.b16 %v456
        %v613 = vunpack.c.l.b16 %v457
        %v614 = vunpack.c.h.b16 %v457
        %v615 = vunpack.c.l.b16 %v458
        %v616 = vunpack.c.h.b16 %v458
        %v617 = vunpack.c.l.b16 %v459
        %v618 = vunpack.c.h.b16 %v459
        %v619 = vunpack.c.l.b16 %v460
        %v620 = vunpack.c.h.b16 %v460
        %v621 = vpack.c.b16 %v559, %v557
        %v622 = vpack.c.b16 %v560, %v558
        %v623 = vpack.c.b16 %v563, %v561
        %v624 = vpack.c.b16 %v564, %v562
        %v625 = vpack.c.b16 %v567, %v565
        %v626 = vpack.c.b16 %v568, %v566
        %v627 = vpack.c.b16 %v571, %v569
        %v628 = vpack.c.b16 %v572, %v570
        %v629 = vpack.c.b16 %v575, %v573
        %v630 = vpack.c.b16 %v576, %v574
        %v631 = vpack.c.b16 %v579, %v577
        %v632 = vpack.c.b16 %v580, %v578
        %v633 = vpack.c.b16 %v583, %v581
        %v634 = vpack.c.b16 %v584, %v582
        %v635 = vpack.c.b16 %v587, %v585
        %v636 = vpack.c.b16 %v588, %v586
        %v637 = vpack.c.b16 %v591, %v589
        %v638 = vpack.c.b16 %v592, %v590
        %v639 = vpack.c.b16 %v595, %v593
        %v640 = vpack.c.b16 %v596, %v594
        %v641 = vpack.c.b16 %v599, %v597
        %v642 = vpack.c.b16 %v600, %v598
        %v643 = vpack.c.b16 %v603, %v601
        %v644 = vpack.c.b16 %v604, %v602
        %v645 = vpack.c.b16 %v607, %v605
        %v646 = vpack.c.b16 %v608, %v606
        %v647 = vpack.c.b16 %v611, %v609
        %v648 = vpack.c.b16 %v612, %v610
        %v649 = vpack.c.b16 %v615, %v613
        %v650 = vpack.c.b16 %v616, %v614
        %v651 = vpack.c.b16 %v619, %v617
        %v652 = vpack.c.b16 %v620, %v618
        %v717 = vunpack.c.l.b16 %v493
        %v718 = vunpack.c.l.b16 %v494
        %v719 = vunpack.c.l.b16 %v495
        %v720 = vunpack.c.l.b16 %v496
        %v721 = vunpack.c.l.b16 %v497
        %v722 = vunpack.c.l.b16 %v498
        %v723 = vunpack.c.l.b16 %v499
        %v724 = vunpack.c.l.b16 %v500
        %v725 = vunpack.c.l.b16 %v501
        %v726 = vunpack.c.l.b16 %v502
        %v727 = vunpack.c.l.b16 %v503
        %v728 = vunpack.c.l.b16 %v504
        %v729 = vunpack.c.l.b16 %v505
        %v730 = vunpack.c.l.b16 %v506
        %v731 = vunpack.c.l.b16 %v507
        %v732 = vunpack.c.l.b16 %v508
        %v733 = vunpack.c.l.b16 %v509
        %v734 = vunpack.c.l.b16 %v510
        %v735 = vunpack.c.l.b16 %v511
        %v736 = vunpack.c.l.b16 %v512
        %v737 = vunpack.c.l.b16 %v513
        %v738 = vunpack.c.l.b16 %v514
        %v739 = vunpack.c.l.b16 %v515
        %v740 = vunpack.c.l.b16 %v516
        %v741 = vunpack.c.l.b16 %v517
        %v742 = vunpack.c.l.b16 %v518
        %v743 = vunpack.c.l.b16 %v519
        %v744 = vunpack.c.l.b16 %v520
        %v745 = vunpack.c.l.b16 %v521
        %v746 = vunpack.c.l.b16 %v522
        %v747 = vunpack.c.l.b16 %v523
        %v748 = vunpack.c.l.b16 %v524
        %v749 = vpack.c.b16 %v718, %v717
        %v750 = vpack.c.b16 %v720, %v719
        %v751 = vpack.c.b16 %v722, %v721
        %v752 = vpack.c.b16 %v724, %v723
        %v753 = vpack.c.b16 %v726, %v725
        %v754 = vpack.c.b16 %v728, %v727
        %v755 = vpack.c.b16 %v730, %v729
        %v756 = vpack.c.b16 %v732, %v731
        %v757 = vpack.c.b16 %v734, %v733
        %v758 = vpack.c.b16 %v736, %v735
        %v759 = vpack.c.b16 %v738, %v737
        %v760 = vpack.c.b16 %v740, %v739
        %v761 = vpack.c.b16 %v742, %v741
        %v762 = vpack.c.b16 %v744, %v743
        %v763 = vpack.c.b16 %v746, %v745
        %v764 = vpack.c.b16 %v748, %v747
        %781 = vmatprep.subr.bf16.mxu0 0
        %782 = vmatpush1.bf16.msra.mxu0 %v749
        %783 = vmatprep.subr.bf16.mxu0 0
        %784 = vmatpush1.bf16.msra.mxu0 %v750
        %785 = vmatprep.subr.bf16.mxu0 0
        %786 = vmatpush1.bf16.msra.mxu0 %v751
        %787 = vmatprep.subr.bf16.mxu0 0
        %788 = vmatpush1.bf16.msra.mxu0 %v752
        %789 = vmatprep.subr.bf16.mxu0 0
        %790 = vmatpush1.bf16.msra.mxu0 %v753
        %791 = vmatprep.subr.bf16.mxu0 0
        %792 = vmatpush1.bf16.msra.mxu0 %v754
        %793 = vmatprep.subr.bf16.mxu0 0
        %794 = vmatpush1.bf16.msra.mxu0 %v755
        %795 = vmatprep.subr.bf16.mxu0 0
        %796 = vmatpush1.bf16.msra.mxu0 %v756
        %797 = vmatprep.subr.bf16.mxu0 0
        %798 = vmatpush1.bf16.msra.mxu0 %v757
        %799 = vmatprep.subr.bf16.mxu0 0
        %800 = vmatpush1.bf16.msra.mxu0 %v758
        %801 = vmatprep.subr.bf16.mxu0 0
        %802 = vmatpush1.bf16.msra.mxu0 %v759
        %803 = vmatprep.subr.bf16.mxu0 0
        %804 = vmatpush1.bf16.msra.mxu0 %v760
        %805 = vmatprep.subr.bf16.mxu0 0
        %806 = vmatpush1.bf16.msra.mxu0 %v761
        %807 = vmatprep.subr.bf16.mxu0 0
        %808 = vmatpush1.bf16.msra.mxu0 %v762
        %809 = vmatprep.subr.bf16.mxu0 0
        %810 = vmatpush1.bf16.msra.mxu0 %v763
        %811 = vmatprep.subr.bf16.mxu0 0
        %812 = vmatpush1.bf16.msra.mxu0 %v764
        %813 = vmatprep.mubr.bf16.mxu0 %v622
        %814 = vmatmul.mubr.bf16.gmra.mrb[0].mxu0 %v621
        %v815 = vpop.f32.mrb[0].mxu0
        %v816 = vadd.f32 0.0, %v815
        %v817 = vpop.f32.mrb[0].mxu0
        %v818 = vpop.f32.mrb[0].mxu0
        %v819 = vadd.f32 0.0, %v818
        %v820 = vpop.f32.mrb[0].mxu0
        %821 = vmatprep.mubr.bf16.mxu0 %v624
        %822 = vmatmul.mubr.bf16.gmra.mrb[0].mxu0 %v623
        %v823 = vpop.f32.mrb[0].mxu0
        %v824 = vadd.f32 0.0, %v823
        %v825 = vpop.f32.mrb[0].mxu0
        %v826 = vpop.f32.mrb[0].mxu0
        %v827 = vadd.f32 0.0, %v826
        %v828 = vpop.f32.mrb[0].mxu0
        %829 = vmatprep.mubr.bf16.mxu0 %v626
        %830 = vmatmul.mubr.bf16.gmra.mrb[0].mxu0 %v625
        %v831 = vpop.f32.mrb[0].mxu0
        %v832 = vadd.f32 0.0, %v831
        %v833 = vpop.f32.mrb[0].mxu0
        %v834 = vpop.f32.mrb[0].mxu0
        %v835 = vadd.f32 0.0, %v834
        %v836 = vpop.f32.mrb[0].mxu0
        %837 = vmatprep.mubr.bf16.mxu0 %v628
        %838 = vmatmul.mubr.bf16.gmra.mrb[0].mxu0 %v627
        %v839 = vpop.f32.mrb[0].mxu0
        %v840 = vadd.f32 0.0, %v839
        %v841 = vpop.f32.mrb[0].mxu0
        %v842 = vpop.f32.mrb[0].mxu0
        %v843 = vadd.f32 0.0, %v842
        %v844 = vpop.f32.mrb[0].mxu0
        %845 = vmatprep.mubr.bf16.mxu0 %v630
        %846 = vmatmul.mubr.bf16.gmra.mrb[0].mxu0 %v629
        %v847 = vpop.f32.mrb[0].mxu0
        %v848 = vadd.f32 0.0, %v847
        %v849 = vpop.f32.mrb[0].mxu0
        %v850 = vpop.f32.mrb[0].mxu0
        %v851 = vadd.f32 0.0, %v850
        %v852 = vpop.f32.mrb[0].mxu0
        %853 = vmatprep.mubr.bf16.mxu0 %v632
        %854 = vmatmul.mubr.bf16.gmra.mrb[0].mxu0 %v631
        %v855 = vpop.f32.mrb[0].mxu0
        %v856 = vadd.f32 0.0, %v855
        %v857 = vpop.f32.mrb[0].mxu0
        %v858 = vpop.f32.mrb[0].mxu0
        %v859 = vadd.f32 0.0, %v858
        %v860 = vpop.f32.mrb[0].mxu0
        %861 = vmatprep.mubr.bf16.mxu0 %v634
        %862 = vmatmul.mubr.bf16.gmra.mrb[0].mxu0 %v633
        %v863 = vpop.f32.mrb[0].mxu0
        %v864 = vadd.f32 0.0, %v863
        %v865 = vpop.f32.mrb[0].mxu0
        %v866 = vpop.f32.mrb[0].mxu0
        %v867 = vadd.f32 0.0, %v866
        %v868 = vpop.f32.mrb[0].mxu0
        %869 = vmatprep.mubr.bf16.mxu0 %v636
        %870 = vmatmul.mubr.bf16.gmra.mrb[0].mxu0 %v635
        %v871 = vpop.f32.mrb[0].mxu0
        %v872 = vadd.f32 0.0, %v871
        %v873 = vpop.f32.mrb[0].mxu0
        %v874 = vpop.f32.mrb[0].mxu0
        %v875 = vadd.f32 0.0, %v874
        %v876 = vpop.f32.mrb[0].mxu0
        %877 = vmatprep.mubr.bf16.mxu0 %v638
        %878 = vmatmul.mubr.bf16.gmra.mrb[0].mxu0 %v637
        %v879 = vpop.f32.mrb[0].mxu0
        %v880 = vadd.f32 0.0, %v879
        %v881 = vpop.f32.mrb[0].mxu0
        %v882 = vpop.f32.mrb[0].mxu0
        %v883 = vadd.f32 0.0, %v882
        %v884 = vpop.f32.mrb[0].mxu0
        %885 = vmatprep.mubr.bf16.mxu0 %v640
        %886 = vmatmul.mubr.bf16.gmra.mrb[0].mxu0 %v639
        %v887 = vpop.f32.mrb[0].mxu0
        %v888 = vadd.f32 0.0, %v887
        %v889 = vpop.f32.mrb[0].mxu0
        %v890 = vpop.f32.mrb[0].mxu0
        %v891 = vadd.f32 0.0, %v890
        %v892 = vpop.f32.mrb[0].mxu0
        %893 = vmatprep.mubr.bf16.mxu0 %v642
        %894 = vmatmul.mubr.bf16.gmra.mrb[0].mxu0 %v641
        %v895 = vpop.f32.mrb[0].mxu0
        %v896 = vadd.f32 0.0, %v895
        %v897 = vpop.f32.mrb[0].mxu0
        %v898 = vpop.f32.mrb[0].mxu0
        %v899 = vadd.f32 0.0, %v898
        %v900 = vpop.f32.mrb[0].mxu0
        %901 = vmatprep.mubr.bf16.mxu0 %v644
        %902 = vmatmul.mubr.bf16.gmra.mrb[0].mxu0 %v643
        %v903 = vpop.f32.mrb[0].mxu0
        %v904 = vadd.f32 0.0, %v903
        %v905 = vpop.f32.mrb[0].mxu0
        %v906 = vpop.f32.mrb[0].mxu0
        %v907 = vadd.f32 0.0, %v906
        %v908 = vpop.f32.mrb[0].mxu0
        %909 = vmatprep.mubr.bf16.mxu0 %v646
        %910 = vmatmul.mubr.bf16.gmra.mrb[0].mxu0 %v645
        %v911 = vpop.f32.mrb[0].mxu0
        %v912 = vadd.f32 0.0, %v911
        %v913 = vpop.f32.mrb[0].mxu0
        %v914 = vpop.f32.mrb[0].mxu0
        %v915 = vadd.f32 0.0, %v914
        %v916 = vpop.f32.mrb[0].mxu0
        %917 = vmatprep.mubr.bf16.mxu0 %v648
        %918 = vmatmul.mubr.bf16.gmra.mrb[0].mxu0 %v647
        %v919 = vpop.f32.mrb[0].mxu0
        %v920 = vadd.f32 0.0, %v919
        %v921 = vpop.f32.mrb[0].mxu0
        %v922 = vpop.f32.mrb[0].mxu0
        %v923 = vadd.f32 0.0, %v922
        %v924 = vpop.f32.mrb[0].mxu0
        %925 = vmatprep.mubr.bf16.mxu0 %v650
        %926 = vmatmul.mubr.bf16.gmra.mrb[0].mxu0 %v649
        %v927 = vpop.f32.mrb[0].mxu0
        %v928 = vadd.f32 0.0, %v927
        %v929 = vpop.f32.mrb[0].mxu0
        %v930 = vpop.f32.mrb[0].mxu0
        %v931 = vadd.f32 0.0, %v930
        %v932 = vpop.f32.mrb[0].mxu0
        %933 = vmatprep.mubr.bf16.mxu0 %v652
        %934 = vmatmul.mubr.bf16.gmra.mrb[0].mxu0 %v651
        %v935 = vpop.f32.mrb[0].mxu0
        %v936 = vadd.f32 0.0, %v935
        %v937 = vpop.f32.mrb[0].mxu0
        %v938 = vpop.f32.mrb[0].mxu0
        %v939 = vadd.f32 0.0, %v938
        %v940 = vpop.f32.mrb[0].mxu0
        %941 = vdwg.mxu0
        %v942 = vadd.f32 %v461, %v816
        %v943 = vadd.f32 %v462, %v819
        %v944 = vadd.f32 %v463, %v824
        %v945 = vadd.f32 %v464, %v827
        %v946 = vadd.f32 %v465, %v832
        %v947 = vadd.f32 %v466, %v835
        %v948 = vadd.f32 %v467, %v840
        %v949 = vadd.f32 %v468, %v843
        %v950 = vadd.f32 %v469, %v848
        %v951 = vadd.f32 %v470, %v851
        %v952 = vadd.f32 %v471, %v856
        %v953 = vadd.f32 %v472, %v859
        %v954 = vadd.f32 %v473, %v864
        %v955 = vadd.f32 %v474, %v867
        %v956 = vadd.f32 %v475, %v872
        %v957 = vadd.f32 %v476, %v875
        %v958 = vadd.f32 %v477, %v880
        %v959 = vadd.f32 %v478, %v883
        %v960 = vadd.f32 %v479, %v888
        %v961 = vadd.f32 %v480, %v891
        %v962 = vadd.f32 %v481, %v896
        %v963 = vadd.f32 %v482, %v899
        %v964 = vadd.f32 %v483, %v904
        %v965 = vadd.f32 %v484, %v907
        %v966 = vadd.f32 %v485, %v912
        %v967 = vadd.f32 %v486, %v915
        %v968 = vadd.f32 %v487, %v920
        %v969 = vadd.f32 %v488, %v923
        %v970 = vadd.f32 %v489, %v928
        %v971 = vadd.f32 %v490, %v931
        %v972 = vadd.f32 %v491, %v936
        %v973 = vadd.f32 %v492, %v939
        %974 = vst [vmem:[#allocation2] sm:$0xff] %v942
        %975 = vst [vmem:[#allocation2 + $0x8] sm:$0xff] %v943
        %976 = vst [vmem:[#allocation2 + $0x10] sm:$0xff] %v944
        %977 = vst [vmem:[#allocation2 + $0x18] sm:$0xff] %v945
        %978 = vst [vmem:[#allocation2 + $0x20] sm:$0xff] %v946
        %979 = vst [vmem:[#allocation2 + $0x28] sm:$0xff] %v947
        %980 = vst [vmem:[#allocation2 + $0x30] sm:$0xff] %v948
        %981 = vst [vmem:[#allocation2 + $0x38] sm:$0xff] %v949
        %982 = vst [vmem:[#allocation2 + $0x40] sm:$0xff] %v950
        %983 = vst [vmem:[#allocation2 + $0x48] sm:$0xff] %v951
        %984 = vst [vmem:[#allocation2 + $0x50] sm:$0xff] %v952
        %985 = vst [vmem:[#allocation2 + $0x58] sm:$0xff] %v953
        %986 = vst [vmem:[#allocation2 + $0x60] sm:$0xff] %v954
        %987 = vst [vmem:[#allocation2 + $0x68] sm:$0xff] %v955
        %988 = vst [vmem:[#allocation2 + $0x70] sm:$0xff] %v956
        %989 = vst [vmem:[#allocation2 + $0x78] sm:$0xff] %v957
        %990 = vst [vmem:[#allocation2 + $0x80] sm:$0xff] %v958
        %991 = vst [vmem:[#allocation2 + $0x88] sm:$0xff] %v959
        %992 = vst [vmem:[#allocation2 + $0x90] sm:$0xff] %v960
        %993 = vst [vmem:[#allocation2 + $0x98] sm:$0xff] %v961
        %994 = vst [vmem:[#allocation2 + $0xa0] sm:$0xff] %v962
        %995 = vst [vmem:[#allocation2 + $0xa8] sm:$0xff] %v963
        %996 = vst [vmem:[#allocation2 + $0xb0] sm:$0xff] %v964
        %997 = vst [vmem:[#allocation2 + $0xb8] sm:$0xff] %v965
        %998 = vst [vmem:[#allocation2 + $0xc0] sm:$0xff] %v966
        %999 = vst [vmem:[#allocation2 + $0xc8] sm:$0xff] %v967
        %1000 = vst [vmem:[#allocation2 + $0xd0] sm:$0xff] %v968
        %1001 = vst [vmem:[#allocation2 + $0xd8] sm:$0xff] %v969
        %1002 = vst [vmem:[#allocation2 + $0xe0] sm:$0xff] %v970
        %1003 = vst [vmem:[#allocation2 + $0xe8] sm:$0xff] %v971
        %1004 = vst [vmem:[#allocation2 + $0xf0] sm:$0xff] %v972
        %1005 = vst [vmem:[#allocation2 + $0xf8] sm:$0xff] %v973
        // Predicated region
        $region57: #{tpu_custom_call.1} parent=43 // pred_check
          %p1006 = pneg %p393
        $region58: #{tpu_custom_call.1} parent=43 // pred_check_branch
          %1008 = sbr.rel (%p1006) target = $region60
        $region59: #{tpu_custom_call.1} parent=43 // pred_region
          %v1009 = vld [vmem:[#allocation2] sm:$0xff]
          %v1010 = vld [vmem:[#allocation2 + $0x8] sm:$0xff]
          %v1011 = vld [vmem:[#allocation2 + $0x10] sm:$0xff]
          %v1012 = vld [vmem:[#allocation2 + $0x18] sm:$0xff]
          %v1013 = vld [vmem:[#allocation2 + $0x20] sm:$0xff]
          %v1014 = vld [vmem:[#allocation2 + $0x28] sm:$0xff]
          %v1015 = vld [vmem:[#allocation2 + $0x30] sm:$0xff]
          %v1016 = vld [vmem:[#allocation2 + $0x38] sm:$0xff]
          %v1017 = vld [vmem:[#allocation2 + $0x40] sm:$0xff]
          %v1018 = vld [vmem:[#allocation2 + $0x48] sm:$0xff]
          %v1019 = vld [vmem:[#allocation2 + $0x50] sm:$0xff]
          %v1020 = vld [vmem:[#allocation2 + $0x58] sm:$0xff]
          %v1021 = vld [vmem:[#allocation2 + $0x60] sm:$0xff]
          %v1022 = vld [vmem:[#allocation2 + $0x68] sm:$0xff]
          %v1023 = vld [vmem:[#allocation2 + $0x70] sm:$0xff]
          %v1024 = vld [vmem:[#allocation2 + $0x78] sm:$0xff]
          %v1025 = vld [vmem:[#allocation2 + $0x80] sm:$0xff]
          %v1026 = vld [vmem:[#allocation2 + $0x88] sm:$0xff]
          %v1027 = vld [vmem:[#allocation2 + $0x90] sm:$0xff]
          %v1028 = vld [vmem:[#allocation2 + $0x98] sm:$0xff]
          %v1029 = vld [vmem:[#allocation2 + $0xa0] sm:$0xff]
          %v1030 = vld [vmem:[#allocation2 + $0xa8] sm:$0xff]
          %v1031 = vld [vmem:[#allocation2 + $0xb0] sm:$0xff]
          %v1032 = vld [vmem:[#allocation2 + $0xb8] sm:$0xff]
          %v1033 = vld [vmem:[#allocation2 + $0xc0] sm:$0xff]
          %v1034 = vld [vmem:[#allocation2 + $0xc8] sm:$0xff]
          %v1035 = vld [vmem:[#allocation2 + $0xd0] sm:$0xff]
          %v1036 = vld [vmem:[#allocation2 + $0xd8] sm:$0xff]
          %v1037 = vld [vmem:[#allocation2 + $0xe0] sm:$0xff]
          %v1038 = vld [vmem:[#allocation2 + $0xe8] sm:$0xff]
          %v1039 = vld [vmem:[#allocation2 + $0xf0] sm:$0xff]
          %v1040 = vld [vmem:[#allocation2 + $0xf8] sm:$0xff]
          %v1041 = vld [vmem:[%s387] sm:$0x1]
          %v1043 = vlaneseq
          %v1044 = vshrl.u32 %v1043, 7
          %v1045 = vsub.s32 0, %v1044
          %v1046 = vrot.slane %v1041, %v1045
          %v1048 = vmul.f32 %v1009, %v1046
          %v1049 = vmul.f32 %v1010, %v1046
          %v1050 = vmul.f32 %v1011, %v1046
          %v1051 = vmul.f32 %v1012, %v1046
          %v1052 = vmul.f32 %v1013, %v1046
          %v1053 = vmul.f32 %v1014, %v1046
          %v1054 = vmul.f32 %v1015, %v1046
          %v1055 = vmul.f32 %v1016, %v1046
          %v1056 = vmul.f32 %v1017, %v1046
          %v1057 = vmul.f32 %v1018, %v1046
          %v1058 = vmul.f32 %v1019, %v1046
          %v1059 = vmul.f32 %v1020, %v1046
          %v1060 = vmul.f32 %v1021, %v1046
          %v1061 = vmul.f32 %v1022, %v1046
          %v1062 = vmul.f32 %v1023, %v1046
          %v1063 = vmul.f32 %v1024, %v1046
          %v1064 = vmul.f32 %v1025, %v1046
          %v1065 = vmul.f32 %v1026, %v1046
          %v1066 = vmul.f32 %v1027, %v1046
          %v1067 = vmul.f32 %v1028, %v1046
          %v1068 = vmul.f32 %v1029, %v1046
          %v1069 = vmul.f32 %v1030, %v1046
          %v1070 = vmul.f32 %v1031, %v1046
          %v1071 = vmul.f32 %v1032, %v1046
          %v1072 = vmul.f32 %v1033, %v1046
          %v1073 = vmul.f32 %v1034, %v1046
          %v1074 = vmul.f32 %v1035, %v1046
          %v1075 = vmul.f32 %v1036, %v1046
          %v1076 = vmul.f32 %v1037, %v1046
          %v1077 = vmul.f32 %v1038, %v1046
          %v1078 = vmul.f32 %v1039, %v1046
          %v1079 = vmul.f32 %v1040, %v1046
          %v1080 = vld [vmem:[%s390] sm:$0x1]
          %v1082 = vlaneseq
          %v1083 = vshrl.u32 %v1082, 7
          %v1084 = vsub.s32 0, %v1083
          %v1085 = vrot.slane %v1080, %v1084
          %v1087 = vadd.f32 %v1048, %v1085
          %v1088 = vadd.f32 %v1049, %v1085
          %v1089 = vadd.f32 %v1050, %v1085
          %v1090 = vadd.f32 %v1051, %v1085
          %v1091 = vadd.f32 %v1052, %v1085
          %v1092 = vadd.f32 %v1053, %v1085
          %v1093 = vadd.f32 %v1054, %v1085
          %v1094 = vadd.f32 %v1055, %v1085
          %v1095 = vadd.f32 %v1056, %v1085
          %v1096 = vadd.f32 %v1057, %v1085
          %v1097 = vadd.f32 %v1058, %v1085
          %v1098 = vadd.f32 %v1059, %v1085
          %v1099 = vadd.f32 %v1060, %v1085
          %v1100 = vadd.f32 %v1061, %v1085
          %v1101 = vadd.f32 %v1062, %v1085
          %v1102 = vadd.f32 %v1063, %v1085
          %v1103 = vadd.f32 %v1064, %v1085
          %v1104 = vadd.f32 %v1065, %v1085
          %v1105 = vadd.f32 %v1066, %v1085
          %v1106 = vadd.f32 %v1067, %v1085
          %v1107 = vadd.f32 %v1068, %v1085
          %v1108 = vadd.f32 %v1069, %v1085
          %v1109 = vadd.f32 %v1070, %v1085
          %v1110 = vadd.f32 %v1071, %v1085
          %v1111 = vadd.f32 %v1072, %v1085
          %v1112 = vadd.f32 %v1073, %v1085
          %v1113 = vadd.f32 %v1074, %v1085
          %v1114 = vadd.f32 %v1075, %v1085
          %v1115 = vadd.f32 %v1076, %v1085
          %v1116 = vadd.f32 %v1077, %v1085
          %v1117 = vadd.f32 %v1078, %v1085
          %v1118 = vadd.f32 %v1079, %v1085
          %v1119 = vmax.f32 %v1087, 0.0
          %v1120 = vmax.f32 %v1088, 0.0
          %v1121 = vmax.f32 %v1089, 0.0
          %v1122 = vmax.f32 %v1090, 0.0
          %v1123 = vmax.f32 %v1091, 0.0
          %v1124 = vmax.f32 %v1092, 0.0
          %v1125 = vmax.f32 %v1093, 0.0
          %v1126 = vmax.f32 %v1094, 0.0
          %v1127 = vmax.f32 %v1095, 0.0
          %v1128 = vmax.f32 %v1096, 0.0
          %v1129 = vmax.f32 %v1097, 0.0
          %v1130 = vmax.f32 %v1098, 0.0
          %v1131 = vmax.f32 %v1099, 0.0
          %v1132 = vmax.f32 %v1100, 0.0
          %v1133 = vmax.f32 %v1101, 0.0
          %v1134 = vmax.f32 %v1102, 0.0
          %v1135 = vmax.f32 %v1103, 0.0
          %v1136 = vmax.f32 %v1104, 0.0
          %v1137 = vmax.f32 %v1105, 0.0
          %v1138 = vmax.f32 %v1106, 0.0
          %v1139 = vmax.f32 %v1107, 0.0
          %v1140 = vmax.f32 %v1108, 0.0
          %v1141 = vmax.f32 %v1109, 0.0
          %v1142 = vmax.f32 %v1110, 0.0
          %v1143 = vmax.f32 %v1111, 0.0
          %v1144 = vmax.f32 %v1112, 0.0
          %v1145 = vmax.f32 %v1113, 0.0
          %v1146 = vmax.f32 %v1114, 0.0
          %v1147 = vmax.f32 %v1115, 0.0
          %v1148 = vmax.f32 %v1116, 0.0
          %v1149 = vmax.f32 %v1117, 0.0
          %v1150 = vmax.f32 %v1118, 0.0
          %v1151 = vpack.c.bf16 %v1120, %v1119
          %v1152 = vpack.c.bf16 %v1122, %v1121
          %v1153 = vpack.c.bf16 %v1124, %v1123
          %v1154 = vpack.c.bf16 %v1126, %v1125
          %v1155 = vpack.c.bf16 %v1128, %v1127
          %v1156 = vpack.c.bf16 %v1130, %v1129
          %v1157 = vpack.c.bf16 %v1132, %v1131
          %v1158 = vpack.c.bf16 %v1134, %v1133
          %v1159 = vpack.c.bf16 %v1136, %v1135
          %v1160 = vpack.c.bf16 %v1138, %v1137
          %v1161 = vpack.c.bf16 %v1140, %v1139
          %v1162 = vpack.c.bf16 %v1142, %v1141
          %v1163 = vpack.c.bf16 %v1144, %v1143
          %v1164 = vpack.c.bf16 %v1146, %v1145
          %v1165 = vpack.c.bf16 %v1148, %v1147
          %v1166 = vpack.c.bf16 %v1150, %v1149
          %v1183 = vunpack.c.l.b16 %v1151
          %v1184 = vunpack.c.h.b16 %v1151
          %v1185 = vunpack.c.l.b16 %v1152
          %v1186 = vunpack.c.h.b16 %v1152
          %v1187 = vunpack.c.l.b16 %v1153
          %v1188 = vunpack.c.h.b16 %v1153
          %v1189 = vunpack.c.l.b16 %v1154
          %v1190 = vunpack.c.h.b16 %v1154
          %v1191 = vunpack.c.l.b16 %v1155
          %v1192 = vunpack.c.h.b16 %v1155
          %v1193 = vunpack.c.l.b16 %v1156
          %v1194 = vunpack.c.h.b16 %v1156
          %v1195 = vunpack.c.l.b16 %v1157
          %v1196 = vunpack.c.h.b16 %v1157
          %v1197 = vunpack.c.l.b16 %v1158
          %v1198 = vunpack.c.h.b16 %v1158
          %v1199 = vunpack.c.l.b16 %v1159
          %v1200 = vunpack.c.h.b16 %v1159
          %v1201 = vunpack.c.l.b16 %v1160
          %v1202 = vunpack.c.h.b16 %v1160
          %v1203 = vunpack.c.l.b16 %v1161
          %v1204 = vunpack.c.h.b16 %v1161
          %v1205 = vunpack.c.l.b16 %v1162
          %v1206 = vunpack.c.h.b16 %v1162
          %v1207 = vunpack.c.l.b16 %v1163
          %v1208 = vunpack.c.h.b16 %v1163
          %v1209 = vunpack.c.l.b16 %v1164
          %v1210 = vunpack.c.h.b16 %v1164
          %v1211 = vunpack.c.l.b16 %v1165
          %v1212 = vunpack.c.h.b16 %v1165
          %v1213 = vunpack.c.l.b16 %v1166
          %v1214 = vunpack.c.h.b16 %v1166
          %v1215 = vpack.c.b16 %v1183, %v1183
          %v1216 = vpack.c.b16 %v1184, %v1184
          %v1217 = vpack.c.b16 %v1185, %v1185
          %v1218 = vpack.c.b16 %v1186, %v1186
          %v1219 = vpack.c.b16 %v1187, %v1187
          %v1220 = vpack.c.b16 %v1188, %v1188
          %v1221 = vpack.c.b16 %v1189, %v1189
          %v1222 = vpack.c.b16 %v1190, %v1190
          %v1223 = vpack.c.b16 %v1191, %v1191
          %v1224 = vpack.c.b16 %v1192, %v1192
          %v1225 = vpack.c.b16 %v1193, %v1193
          %v1226 = vpack.c.b16 %v1194, %v1194
          %v1227 = vpack.c.b16 %v1195, %v1195
          %v1228 = vpack.c.b16 %v1196, %v1196
          %v1229 = vpack.c.b16 %v1197, %v1197
          %v1230 = vpack.c.b16 %v1198, %v1198
          %v1231 = vpack.c.b16 %v1199, %v1199
          %v1232 = vpack.c.b16 %v1200, %v1200
          %v1233 = vpack.c.b16 %v1201, %v1201
          %v1234 = vpack.c.b16 %v1202, %v1202
          %v1235 = vpack.c.b16 %v1203, %v1203
          %v1236 = vpack.c.b16 %v1204, %v1204
          %v1237 = vpack.c.b16 %v1205, %v1205
          %v1238 = vpack.c.b16 %v1206, %v1206
          %v1239 = vpack.c.b16 %v1207, %v1207
          %v1240 = vpack.c.b16 %v1208, %v1208
          %v1241 = vpack.c.b16 %v1209, %v1209
          %v1242 = vpack.c.b16 %v1210, %v1210
          %v1243 = vpack.c.b16 %v1211, %v1211
          %v1244 = vpack.c.b16 %v1212, %v1212
          %v1245 = vpack.c.b16 %v1213, %v1213
          %v1246 = vpack.c.b16 %v1214, %v1214
          %1279 = vst [vmem:[%s371] sm:$0xf] %v1215
          %1280 = vst [vmem:[%s371 + $0x4] sm:$0xf] %v1216
          %1281 = vst [vmem:[%s371 + $0x8] sm:$0xf] %v1217
          %1282 = vst [vmem:[%s371 + $0xc] sm:$0xf] %v1218
          %1283 = vst [vmem:[%s371 + $0x10] sm:$0xf] %v1219
          %1284 = vst [vmem:[%s371 + $0x14] sm:$0xf] %v1220
          %1285 = vst [vmem:[%s371 + $0x18] sm:$0xf] %v1221
          %1286 = vst [vmem:[%s371 + $0x1c] sm:$0xf] %v1222
          %1287 = vst [vmem:[%s371 + $0x20] sm:$0xf] %v1223
          %1288 = vst [vmem:[%s371 + $0x24] sm:$0xf] %v1224
          %1289 = vst [vmem:[%s371 + $0x28] sm:$0xf] %v1225
          %1290 = vst [vmem:[%s371 + $0x2c] sm:$0xf] %v1226
          %1291 = vst [vmem:[%s371 + $0x30] sm:$0xf] %v1227
          %1292 = vst [vmem:[%s371 + $0x34] sm:$0xf] %v1228
          %1293 = vst [vmem:[%s371 + $0x38] sm:$0xf] %v1229
          %1294 = vst [vmem:[%s371 + $0x3c] sm:$0xf] %v1230
          %1295 = vst [vmem:[%s371 + $0x40] sm:$0xf] %v1231
          %1296 = vst [vmem:[%s371 + $0x44] sm:$0xf] %v1232
          %1297 = vst [vmem:[%s371 + $0x48] sm:$0xf] %v1233
          %1298 = vst [vmem:[%s371 + $0x4c] sm:$0xf] %v1234
          %1299 = vst [vmem:[%s371 + $0x50] sm:$0xf] %v1235
          %1300 = vst [vmem:[%s371 + $0x54] sm:$0xf] %v1236
          %1301 = vst [vmem:[%s371 + $0x58] sm:$0xf] %v1237
          %1302 = vst [vmem:[%s371 + $0x5c] sm:$0xf] %v1238
          %1303 = vst [vmem:[%s371 + $0x60] sm:$0xf] %v1239
          %1304 = vst [vmem:[%s371 + $0x64] sm:$0xf] %v1240
          %1305 = vst [vmem:[%s371 + $0x68] sm:$0xf] %v1241
          %1306 = vst [vmem:[%s371 + $0x6c] sm:$0xf] %v1242
          %1307 = vst [vmem:[%s371 + $0x70] sm:$0xf] %v1243
          %1308 = vst [vmem:[%s371 + $0x74] sm:$0xf] %v1244
          %1309 = vst [vmem:[%s371 + $0x78] sm:$0xf] %v1245
          %1310 = vst [vmem:[%s371 + $0x7c] sm:$0xf] %v1246
        $region60: #{tpu_custom_call.1} parent=43 // pred_fallthru
          _
        %s1311 = sand.u32 %s213, 1
        %s1312 = scalar_lea.sflag [#allocation5], %s1311
        %s1313 = sand.u32 %s213, 1
        %s1314 = smul.addr %s1313, 128
        %s1315 = scalar_lea.vmem [#allocation8], %s1314
        // Predicated region
        $region61: #{tpu_custom_call.1} parent=43 // pred_check
          %p1316 = pneg %p223
        $region62: #{tpu_custom_call.1} parent=43 // pred_check_branch
          %1318 = sbr.rel (%p1316) target = $region64
        $region63: #{tpu_custom_call.1} parent=43 // pred_region
          %s1319 = smul.u32 32, %s29
          %s1321 = ssub.s32 2048, 2048
          %1322 = vsyncadd %s1312, %s1321
          %s1323 = sadd.s32 %s30, %s1319
          %s1324 = smul.addr %s1323, 64
          %s1325 = scalar_lea.hbm %s6, %s1324
          %s1326 = sshll.u32 %s1315, 4
          %s1327 = int_to_ptr.vmem [resolvable:$true] %s1326
          %1332 = dma.vmem_to_hbm [thread:$0]  %s1327, 2048, %s1325, %s1312, 64, 64, 4
        $region64: #{tpu_custom_call.1} parent=43 // pred_fallthru
          _
      $region44: #{tpu_custom_call.1} parent=5 // pred_fallthru
        _
      %p1333 = scmp.le.s32.totalorder 2, %s19
      // Predicated region
      $region65: #{tpu_custom_call.1} parent=5 // pred_check
        %p1334 = pneg %p1333
      $region66: #{tpu_custom_call.1} parent=5 // pred_check_branch
        %1336 = sbr.rel (%p1334) target = $region68
      $region67: #{tpu_custom_call.1} parent=5 // pred_region
        %s1337 = ssub.s32 %s19, 2
        // Predicated region
        $region69: #{tpu_custom_call.1} parent=67 // pred_check
          %p1338 = pneg %p229
        $region70: #{tpu_custom_call.1} parent=67 // pred_check_branch
          %1340 = sbr.rel (%p1338) target = $region72
        $region71: #{tpu_custom_call.1} parent=67 // pred_region
          %s1341 = sand.u32 %s214, 1
          %s1342 = scalar_lea.sflag [#allocation5], %s1341
          %s1343 = sand.u32 %s214, 1
          %s1344 = smul.addr %s1343, 128
          %s1345 = scalar_lea.vmem [#allocation8], %s1344
          %1346 = dma.done %s1342, 2048
        $region72: #{tpu_custom_call.1} parent=67 // pred_fallthru
          _
      $region68: #{tpu_custom_call.1} parent=5 // pred_fallthru
        _
    $region6: #{tpu_custom_call.1} parent=1 // loop_footer
      %s23 = sadd.s32 1, %s19
    $region7: #{tpu_custom_call.1} parent=1 // loop_footer_branch
      %18 = sbr.rel target = $region3
    $region8: #{tpu_custom_call.1} parent=1 // loop_exit
      _
    %1347 = vsyncpa [#allocation4], 1
    %s1348 = scalar_lea.sflag [#allocation4], 1
    %1349 = vsyncpa %s1348, 1
    %1350 = vsyncpa [#allocation7], 1
    %1351 = vsyncpa [#allocation5], 1
    %s1352 = scalar_lea.sflag [#allocation5], 1
    %1353 = vsyncpa %s1352, 1

</llo_original>
